<compile_context>
chip_gen: v7x
topology: tpu7x:2x2x1
jax: 0.10.0
libtpu: 0.0.40
codegen_flags: <defaults>
</compile_context>

<pallas_src>
import functools

import jax
import jax.numpy as jnp
import numpy as np
from jax import lax
from jax.experimental import pallas as pl
from jax.experimental.pallas import tpu as pltpu


def _shift_pad_gather_kernel(shift_ref, x_ref, o_ref, *, pad, bsz):
    # shift_ref: SMEM (2*n_blk,) int32 flat per-image shifts [sx0, sy0, sx1, sy1, ...]
    #            (contract: even index = x/width shift, odd index = y/height shift)
    # x_ref:     VMEM (bsz, c, h, w) unpadded input block (BlockSpec-pipelined)
    # o_ref:     VMEM (bsz, c, h, w) shifted output block
    g = pl.program_id(0)
    _, c, h, w = x_ref.shape

    # Shared iotas for building the per-image one-hot selection matrices.
    r_out = lax.broadcasted_iota(jnp.int32, (h, h), 0)  # output row r
    r_in = lax.broadcasted_iota(jnp.int32, (h, h), 1)   # input  row i
    c_in = lax.broadcasted_iota(jnp.int32, (w, w), 0)   # input  col k
    c_out = lax.broadcasted_iota(jnp.int32, (w, w), 1)  # output col j

    for i in range(bsz):
        b = g * bsz + i
        dx = shift_ref[2 * b] - pad      # x / width shift, in [-pad, pad]
        dy = shift_ref[2 * b + 1] - pad  # y / height shift, in [-pad, pad]

        # R[r, i]  = 1 iff i == clamp(r + dy, 0, h-1)   (row crop of replicate pad)
        # Ct[k, j] = 1 iff k == clamp(j + dx, 0, w-1)   (col crop of replicate pad)
        R = (r_in == jnp.clip(r_out + dy, 0, h - 1)).astype(jnp.float32)
        Ct = (c_in == jnp.clip(c_out + dx, 0, w - 1)).astype(jnp.float32)

        for ch in range(c):
            img = x_ref[i, ch].astype(jnp.float32)                    # (h, w)
            t = jnp.dot(img, Ct, preferred_element_type=jnp.float32)  # column select
            out = jnp.dot(R, t, preferred_element_type=jnp.float32)   # row select
            o_ref[i, ch] = out.astype(o_ref.dtype)


def random_shifts_aug(x_nchw, pad, key, images_per_step=8):
    """JAX/Pallas equivalent of RandomShiftsAug(pad).forward(x) for NCHW input."""
    n, c, h, w = x_nchw.shape
    assert h == w

    # torch.randint(0, 2*pad+1, (n,1,1,2)) * 2/(h+2*pad) added to the base grid
    # == integer pixel shifts in [0, 2*pad].  (Different RNG stream than torch.)
    shifts = jax.random.randint(key, (n, 2), 0, 2 * pad + 1, dtype=jnp.int32)

    # Images per grid step: fixed (no divisor collapse for awkward n); grid uses
    # cdiv and the shift table is padded so tail SMEM reads stay in bounds.
    bsz = min(images_per_step, n)
    num_groups = pl.cdiv(n, bsz)
    n_blk = num_groups * bsz
    shifts_flat = shifts.reshape(-1)
    if n_blk != n:
        shifts_flat = jnp.pad(shifts_flat, (0, 2 * (n_blk - n)))

    # VMEM budget from the lane/sublane-padded block footprint:
    #   (in + out) x double-buffer x block  + slack for f32 temporaries.
    itemsize = jnp.dtype(x_nchw.dtype).itemsize
    lane_w = -(-w // 128) * 128
    sub_h = -(-h // 8) * 8
    block_bytes = bsz * c * sub_h * lane_w * itemsize
    vmem_need = 4 * block_bytes + 2 * c * sub_h * lane_w * 4 + (4 << 20)
    vmem_limit = int(min(max(vmem_need, 32 << 20), 64 << 20))

    kernel = functools.partial(_shift_pad_gather_kernel, pad=pad, bsz=bsz)
    cost = pl.CostEstimate(
        flops=2 * n * c * h * w * (h + w),
        transcendentals=0,
        bytes_accessed=2 * n * c * h * w * itemsize,
    )

    out = pl.pallas_call(
        kernel,
        out_shape=jax.ShapeDtypeStruct((n, c, h, w), x_nchw.dtype),
        grid_spec=pltpu.PrefetchScalarGridSpec(
            num_scalar_prefetch=1,
            grid=(num_groups,),
            in_specs=[pl.BlockSpec((bsz, c, h, w), lambda g, s: (g, 0, 0, 0))],
            out_specs=pl.BlockSpec((bsz, c, h, w), lambda g, s: (g, 0, 0, 0)),
        ),
        compiler_params=pltpu.CompilerParams(
            dimension_semantics=("parallel",),
            vmem_limit_bytes=vmem_limit,
        ),
        cost_estimate=cost,
    )(shifts_flat, x_nchw)

    return out, shifts


def _grid_sample_reference(x_nchw, shifts, pad):
    """Pure-JAX replica of the torch math: replicate pad + base grid + shift +
    bilinear grid_sample (align_corners=False, padding_mode='zeros').  A real
    bilinear sampler, so it independently validates the integer-crop shortcut
    (and the in-kernel pad fusion) used by the kernel."""
    n, c, h, w = x_nchw.shape
    hp = h + 2 * pad
    x_pad = jnp.pad(x_nchw, ((0, 0), (0, 0), (pad, pad), (pad, pad)), mode="edge")

    eps = 1.0 / hp
    arange = jnp.linspace(-1.0 + eps, 1.0 - eps, hp, dtype=jnp.float32)[:h]
    base_x = jnp.broadcast_to(arange[None, :], (h, h))  # x varies along columns
    base_y = base_x.T                                   # y varies along rows

    def sample_one(img, shift):  # img (c, hp, hp), shift (2,) float
        gx = base_x + shift[0] * (2.0 / hp)
        gy = base_y + shift[1] * (2.0 / hp)
        ix = (gx + 1.0) * hp / 2.0 - 0.5
        iy = (gy + 1.0) * hp / 2.0 - 0.5
        ix0 = jnp.floor(ix)
        iy0 = jnp.floor(iy)

        def tap(xx, yy):
            valid = (xx >= 0) & (xx <= hp - 1) & (yy >= 0) & (yy <= hp - 1)
            xc = jnp.clip(xx, 0, hp - 1).astype(jnp.int32)
            yc = jnp.clip(yy, 0, hp - 1).astype(jnp.int32)
            v = img[:, yc, xc]  # (c, h, w)
            return jnp.where(valid[None], v, 0.0)

        wx1 = ix - ix0
        wy1 = iy - iy0
        wx0 = 1.0 - wx1
        wy0 = 1.0 - wy1
        return (tap(ix0, iy0) * (wx0 * wy0)[None]
                + tap(ix0 + 1.0, iy0) * (wx1 * wy0)[None]
                + tap(ix0, iy0 + 1.0) * (wx0 * wy1)[None]
                + tap(ix0 + 1.0, iy0 + 1.0) * (wx1 * wy1)[None])

    return jax.vmap(sample_one)(x_pad, shifts.astype(jnp.float32))


if __name__ == "__main__":
    key = jax.random.PRNGKey(0)

    # Case 1: shapes implied by the module spec (small).
    pad = 4
    n, c, h, w = 2, 4, 16, 16
    k_x, k_s, key = jax.random.split(key, 3)
    x = jax.random.normal(k_x, (n, c, h, w), dtype=jnp.float32)

    out, shifts = random_shifts_aug(x, pad, k_s)
    out = jax.block_until_ready(out)
    assert out.shape == (n, c, h, w) and out.dtype == x.dtype

    ref = _grid_sample_reference(x, shifts, pad)
    np.testing.assert_allclose(np.asarray(out), np.asarray(ref), rtol=1e-4, atol=1e-3)

    # Case 2: multi-step grid (n not fully packed into one block) to exercise the
    # batched-per-step path and the pad-fusion gather for a different c/h/w.
    n2, c2, h2, w2, pad2 = 4, 3, 24, 24, 4
    k_x2, k_s2, key = jax.random.split(key, 3)
    x2 = jax.random.normal(k_x2, (n2, c2, h2, w2), dtype=jnp.float32)

    out2, shifts2 = random_shifts_aug(x2, pad2, k_s2, images_per_step=2)
    out2 = jax.block_until_ready(out2)
    assert out2.shape == (n2, c2, h2, w2) and out2.dtype == x2.dtype

    ref2 = _grid_sample_reference(x2, shifts2, pad2)
    np.testing.assert_allclose(np.asarray(out2), np.asarray(ref2), rtol=1e-4, atol=1e-3)

    print("KERNEL_OK")
</pallas_src>

<mosaic_0001>
module attributes {stable_mosaic.version = 11 : i64} {
  func.func @_shift_pad_gather_kernel(%arg0: i32, %arg1: memref<4xi32, #tpu.memory_space<smem>>, %arg2: memref<2x4x16x16xf32, #tpu.memory_space<vmem>>, %arg3: memref<2x4x16x16xf32, #tpu.memory_space<vmem>>) attributes {dimension_semantics = [#tpu.dimension_semantics<parallel>], iteration_bounds = array<i64: 1>, scalar_prefetch = 1 : i64, scratch_operands = 0 : i64, tpu.core_type = #tpu.core_type<tc>, window_params = [{transform_indices = @transform_0, window_bounds = array<i64: 2, 4, 16, 16>}, {transform_indices = @transform_1, window_bounds = array<i64: 2, 4, 16, 16>}]} {
    %0 = tpu.iota {dimensions = array<i32: 0>} : vector<16x16xi32>
    %1 = tpu.iota {dimensions = array<i32: 1>} : vector<16x16xi32>
    %2 = tpu.iota {dimensions = array<i32: 0>} : vector<16x16xi32>
    %3 = tpu.iota {dimensions = array<i32: 1>} : vector<16x16xi32>
    %c2_i32 = arith.constant 2 : i32
    %4 = arith.muli %arg0, %c2_i32 : i32
    %c0_i32 = arith.constant 0 : i32
    %5 = arith.addi %4, %c0_i32 : i32
    %c2_i32_0 = arith.constant 2 : i32
    %6 = arith.muli %c2_i32_0, %5 : i32
    %7 = arith.index_cast %6 : i32 to index
    %8 = memref.load %arg1[%7] : memref<4xi32, #tpu.memory_space<smem>>
    %c4_i32 = arith.constant 4 : i32
    %9 = arith.subi %8, %c4_i32 : i32
    %c2_i32_1 = arith.constant 2 : i32
    %10 = arith.muli %c2_i32_1, %5 : i32
    %c1_i32 = arith.constant 1 : i32
    %11 = arith.addi %10, %c1_i32 : i32
    %12 = arith.index_cast %11 : i32 to index
    %13 = memref.load %arg1[%12] : memref<4xi32, #tpu.memory_space<smem>>
    %c4_i32_2 = arith.constant 4 : i32
    %14 = arith.subi %13, %c4_i32_2 : i32
    %15 = vector.broadcast %14 : i32 to vector<16x16xi32>
    %16 = arith.addi %0, %15 : vector<16x16xi32>
    %c0_i32_3 = arith.constant 0 : i32
    %c15_i32 = arith.constant 15 : i32
    %17 = vector.broadcast %c0_i32_3 : i32 to vector<16x16xi32>
    %18 = arith.maxsi %17, %16 : vector<16x16xi32>
    %19 = vector.broadcast %c15_i32 : i32 to vector<16x16xi32>
    %20 = arith.minsi %19, %18 : vector<16x16xi32>
    %21 = arith.cmpi eq, %1, %20 : vector<16x16xi32>
    %22 = arith.extui %21 : vector<16x16xi1> to vector<16x16xi32>
    %23 = arith.sitofp %22 : vector<16x16xi32> to vector<16x16xf32>
    %24 = vector.broadcast %9 : i32 to vector<16x16xi32>
    %25 = arith.addi %3, %24 : vector<16x16xi32>
    %c0_i32_4 = arith.constant 0 : i32
    %c15_i32_5 = arith.constant 15 : i32
    %26 = vector.broadcast %c0_i32_4 : i32 to vector<16x16xi32>
    %27 = arith.maxsi %26, %25 : vector<16x16xi32>
    %28 = vector.broadcast %c15_i32_5 : i32 to vector<16x16xi32>
    %29 = arith.minsi %28, %27 : vector<16x16xi32>
    %30 = arith.cmpi eq, %2, %29 : vector<16x16xi32>
    %31 = arith.extui %30 : vector<16x16xi1> to vector<16x16xi32>
    %32 = arith.sitofp %31 : vector<16x16xi32> to vector<16x16xf32>
    %c0 = arith.constant 0 : index
    %c0_6 = arith.constant 0 : index
    %c0_7 = arith.constant 0 : index
    %c0_8 = arith.constant 0 : index
    %33 = vector.load %arg2[%c0, %c0_6, %c0_7, %c0_8] : memref<2x4x16x16xf32, #tpu.memory_space<vmem>>, vector<1x1x16x16xf32>
    %34 = vector.shape_cast %33 : vector<1x1x16x16xf32> to vector<16x16xf32>
    %cst = arith.constant dense<0.000000e+00> : vector<16x16xf32>
    %35 = tpu.matmul %34, %32, %cst {dimension_numbers = #tpu.dot_dimension_numbers<[1], [0], [0], [1], [0, 0, 1, 1], [], []>} : vector<16x16xf32>, vector<16x16xf32>, vector<16x16xf32> -> vector<16x16xf32>
    %cst_9 = arith.constant dense<0.000000e+00> : vector<16x16xf32>
    %36 = tpu.matmul %23, %35, %cst_9 {dimension_numbers = #tpu.dot_dimension_numbers<[1], [0], [0], [1], [0, 0, 1, 1], [], []>} : vector<16x16xf32>, vector<16x16xf32>, vector<16x16xf32> -> vector<16x16xf32>
    %c0_10 = arith.constant 0 : index
    %c0_11 = arith.constant 0 : index
    %c0_12 = arith.constant 0 : index
    %c0_13 = arith.constant 0 : index
    %37 = vector.load %arg3[%c0_10, %c0_11, %c0_12, %c0_13] : memref<2x4x16x16xf32, #tpu.memory_space<vmem>>, vector<1x1x16x16xf32>
    %38 = vector.shape_cast %37 : vector<1x1x16x16xf32> to vector<16x16xf32>
    %39 = vector.shape_cast %36 : vector<16x16xf32> to vector<1x1x16x16xf32>
    tpu.vector_store %arg3[%c0_10, %c0_11, %c0_12, %c0_13], %39 {strides = array<i32>} : memref<2x4x16x16xf32, #tpu.memory_space<vmem>>, vector<1x1x16x16xf32>,
    %c0_14 = arith.constant 0 : index
    %c1 = arith.constant 1 : index
    %c0_15 = arith.constant 0 : index
    %c0_16 = arith.constant 0 : index
    %40 = vector.load %arg2[%c0_14, %c1, %c0_15, %c0_16] : memref<2x4x16x16xf32, #tpu.memory_space<vmem>>, vector<1x1x16x16xf32>
    %41 = vector.shape_cast %40 : vector<1x1x16x16xf32> to vector<16x16xf32>
    %cst_17 = arith.constant dense<0.000000e+00> : vector<16x16xf32>
    %42 = tpu.matmul %41, %32, %cst_17 {dimension_numbers = #tpu.dot_dimension_numbers<[1], [0], [0], [1], [0, 0, 1, 1], [], []>} : vector<16x16xf32>, vector<16x16xf32>, vector<16x16xf32> -> vector<16x16xf32>
    %cst_18 = arith.constant dense<0.000000e+00> : vector<16x16xf32>
    %43 = tpu.matmul %23, %42, %cst_18 {dimension_numbers = #tpu.dot_dimension_numbers<[1], [0], [0], [1], [0, 0, 1, 1], [], []>} : vector<16x16xf32>, vector<16x16xf32>, vector<16x16xf32> -> vector<16x16xf32>
    %c0_19 = arith.constant 0 : index
    %c1_20 = arith.constant 1 : index
    %c0_21 = arith.constant 0 : index
    %c0_22 = arith.constant 0 : index
    %44 = vector.load %arg3[%c0_19, %c1_20, %c0_21, %c0_22] : memref<2x4x16x16xf32, #tpu.memory_space<vmem>>, vector<1x1x16x16xf32>
    %45 = vector.shape_cast %44 : vector<1x1x16x16xf32> to vector<16x16xf32>
    %46 = vector.shape_cast %43 : vector<16x16xf32> to vector<1x1x16x16xf32>
    tpu.vector_store %arg3[%c0_19, %c1_20, %c0_21, %c0_22], %46 {strides = array<i32>} : memref<2x4x16x16xf32, #tpu.memory_space<vmem>>, vector<1x1x16x16xf32>,
    %c0_23 = arith.constant 0 : index
    %c2 = arith.constant 2 : index
    %c0_24 = arith.constant 0 : index
    %c0_25 = arith.constant 0 : index
    %47 = vector.load %arg2[%c0_23, %c2, %c0_24, %c0_25] : memref<2x4x16x16xf32, #tpu.memory_space<vmem>>, vector<1x1x16x16xf32>
    %48 = vector.shape_cast %47 : vector<1x1x16x16xf32> to vector<16x16xf32>
    %cst_26 = arith.constant dense<0.000000e+00> : vector<16x16xf32>
    %49 = tpu.matmul %48, %32, %cst_26 {dimension_numbers = #tpu.dot_dimension_numbers<[1], [0], [0], [1], [0, 0, 1, 1], [], []>} : vector<16x16xf32>, vector<16x16xf32>, vector<16x16xf32> -> vector<16x16xf32>
    %cst_27 = arith.constant dense<0.000000e+00> : vector<16x16xf32>
    %50 = tpu.matmul %23, %49, %cst_27 {dimension_numbers = #tpu.dot_dimension_numbers<[1], [0], [0], [1], [0, 0, 1, 1], [], []>} : vector<16x16xf32>, vector<16x16xf32>, vector<16x16xf32> -> vector<16x16xf32>
    %c0_28 = arith.constant 0 : index
    %c2_29 = arith.constant 2 : index
    %c0_30 = arith.constant 0 : index
    %c0_31 = arith.constant 0 : index
    %51 = vector.load %arg3[%c0_28, %c2_29, %c0_30, %c0_31] : memref<2x4x16x16xf32, #tpu.memory_space<vmem>>, vector<1x1x16x16xf32>
    %52 = vector.shape_cast %51 : vector<1x1x16x16xf32> to vector<16x16xf32>
    %53 = vector.shape_cast %50 : vector<16x16xf32> to vector<1x1x16x16xf32>
    tpu.vector_store %arg3[%c0_28, %c2_29, %c0_30, %c0_31], %53 {strides = array<i32>} : memref<2x4x16x16xf32, #tpu.memory_space<vmem>>, vector<1x1x16x16xf32>,
    %c0_32 = arith.constant 0 : index
    %c3 = arith.constant 3 : index
    %c0_33 = arith.constant 0 : index
    %c0_34 = arith.constant 0 : index
    %54 = vector.load %arg2[%c0_32, %c3, %c0_33, %c0_34] : memref<2x4x16x16xf32, #tpu.memory_space<vmem>>, vector<1x1x16x16xf32>
    %55 = vector.shape_cast %54 : vector<1x1x16x16xf32> to vector<16x16xf32>
    %cst_35 = arith.constant dense<0.000000e+00> : vector<16x16xf32>
    %56 = tpu.matmul %55, %32, %cst_35 {dimension_numbers = #tpu.dot_dimension_numbers<[1], [0], [0], [1], [0, 0, 1, 1], [], []>} : vector<16x16xf32>, vector<16x16xf32>, vector<16x16xf32> -> vector<16x16xf32>
    %cst_36 = arith.constant dense<0.000000e+00> : vector<16x16xf32>
    %57 = tpu.matmul %23, %56, %cst_36 {dimension_numbers = #tpu.dot_dimension_numbers<[1], [0], [0], [1], [0, 0, 1, 1], [], []>} : vector<16x16xf32>, vector<16x16xf32>, vector<16x16xf32> -> vector<16x16xf32>
    %c0_37 = arith.constant 0 : index
    %c3_38 = arith.constant 3 : index
    %c0_39 = arith.constant 0 : index
    %c0_40 = arith.constant 0 : index
    %58 = vector.load %arg3[%c0_37, %c3_38, %c0_39, %c0_40] : memref<2x4x16x16xf32, #tpu.memory_space<vmem>>, vector<1x1x16x16xf32>
    %59 = vector.shape_cast %58 : vector<1x1x16x16xf32> to vector<16x16xf32>
    %60 = vector.shape_cast %57 : vector<16x16xf32> to vector<1x1x16x16xf32>
    tpu.vector_store %arg3[%c0_37, %c3_38, %c0_39, %c0_40], %60 {strides = array<i32>} : memref<2x4x16x16xf32, #tpu.memory_space<vmem>>, vector<1x1x16x16xf32>,
    %c2_i32_41 = arith.constant 2 : i32
    %61 = arith.muli %arg0, %c2_i32_41 : i32
    %c1_i32_42 = arith.constant 1 : i32
    %62 = arith.addi %61, %c1_i32_42 : i32
    %c2_i32_43 = arith.constant 2 : i32
    %63 = arith.muli %c2_i32_43, %62 : i32
    %64 = arith.index_cast %63 : i32 to index
    %65 = memref.load %arg1[%64] : memref<4xi32, #tpu.memory_space<smem>>
    %c4_i32_44 = arith.constant 4 : i32
    %66 = arith.subi %65, %c4_i32_44 : i32
    %c2_i32_45 = arith.constant 2 : i32
    %67 = arith.muli %c2_i32_45, %62 : i32
    %c1_i32_46 = arith.constant 1 : i32
    %68 = arith.addi %67, %c1_i32_46 : i32
    %69 = arith.index_cast %68 : i32 to index
    %70 = memref.load %arg1[%69] : memref<4xi32, #tpu.memory_space<smem>>
    %c4_i32_47 = arith.constant 4 : i32
    %71 = arith.subi %70, %c4_i32_47 : i32
    %72 = vector.broadcast %71 : i32 to vector<16x16xi32>
    %73 = arith.addi %0, %72 : vector<16x16xi32>
    %c0_i32_48 = arith.constant 0 : i32
    %c15_i32_49 = arith.constant 15 : i32
    %74 = vector.broadcast %c0_i32_48 : i32 to vector<16x16xi32>
    %75 = arith.maxsi %74, %73 : vector<16x16xi32>
    %76 = vector.broadcast %c15_i32_49 : i32 to vector<16x16xi32>
    %77 = arith.minsi %76, %75 : vector<16x16xi32>
    %78 = arith.cmpi eq, %1, %77 : vector<16x16xi32>
    %79 = arith.extui %78 : vector<16x16xi1> to vector<16x16xi32>
    %80 = arith.sitofp %79 : vector<16x16xi32> to vector<16x16xf32>
    %81 = vector.broadcast %66 : i32 to vector<16x16xi32>
    %82 = arith.addi %3, %81 : vector<16x16xi32>
    %c0_i32_50 = arith.constant 0 : i32
    %c15_i32_51 = arith.constant 15 : i32
    %83 = vector.broadcast %c0_i32_50 : i32 to vector<16x16xi32>
    %84 = arith.maxsi %83, %82 : vector<16x16xi32>
    %85 = vector.broadcast %c15_i32_51 : i32 to vector<16x16xi32>
    %86 = arith.minsi %85, %84 : vector<16x16xi32>
    %87 = arith.cmpi eq, %2, %86 : vector<16x16xi32>
    %88 = arith.extui %87 : vector<16x16xi1> to vector<16x16xi32>
    %89 = arith.sitofp %88 : vector<16x16xi32> to vector<16x16xf32>
    %c1_52 = arith.constant 1 : index
    %c0_53 = arith.constant 0 : index
    %c0_54 = arith.constant 0 : index
    %c0_55 = arith.constant 0 : index
    %90 = vector.load %arg2[%c1_52, %c0_53, %c0_54, %c0_55] : memref<2x4x16x16xf32, #tpu.memory_space<vmem>>, vector<1x1x16x16xf32>
    %91 = vector.shape_cast %90 : vector<1x1x16x16xf32> to vector<16x16xf32>
    %cst_56 = arith.constant dense<0.000000e+00> : vector<16x16xf32>
    %92 = tpu.matmul %91, %89, %cst_56 {dimension_numbers = #tpu.dot_dimension_numbers<[1], [0], [0], [1], [0, 0, 1, 1], [], []>} : vector<16x16xf32>, vector<16x16xf32>, vector<16x16xf32> -> vector<16x16xf32>
    %cst_57 = arith.constant dense<0.000000e+00> : vector<16x16xf32>
    %93 = tpu.matmul %80, %92, %cst_57 {dimension_numbers = #tpu.dot_dimension_numbers<[1], [0], [0], [1], [0, 0, 1, 1], [], []>} : vector<16x16xf32>, vector<16x16xf32>, vector<16x16xf32> -> vector<16x16xf32>
    %c1_58 = arith.constant 1 : index
    %c0_59 = arith.constant 0 : index
    %c0_60 = arith.constant 0 : index
    %c0_61 = arith.constant 0 : index
    %94 = vector.load %arg3[%c1_58, %c0_59, %c0_60, %c0_61] : memref<2x4x16x16xf32, #tpu.memory_space<vmem>>, vector<1x1x16x16xf32>
    %95 = vector.shape_cast %94 : vector<1x1x16x16xf32> to vector<16x16xf32>
    %96 = vector.shape_cast %93 : vector<16x16xf32> to vector<1x1x16x16xf32>
    tpu.vector_store %arg3[%c1_58, %c0_59, %c0_60, %c0_61], %96 {strides = array<i32>} : memref<2x4x16x16xf32, #tpu.memory_space<vmem>>, vector<1x1x16x16xf32>,
    %c1_62 = arith.constant 1 : index
    %c1_63 = arith.constant 1 : index
    %c0_64 = arith.constant 0 : index
    %c0_65 = arith.constant 0 : index
    %97 = vector.load %arg2[%c1_62, %c1_63, %c0_64, %c0_65] : memref<2x4x16x16xf32, #tpu.memory_space<vmem>>, vector<1x1x16x16xf32>
    %98 = vector.shape_cast %97 : vector<1x1x16x16xf32> to vector<16x16xf32>
    %cst_66 = arith.constant dense<0.000000e+00> : vector<16x16xf32>
    %99 = tpu.matmul %98, %89, %cst_66 {dimension_numbers = #tpu.dot_dimension_numbers<[1], [0], [0], [1], [0, 0, 1, 1], [], []>} : vector<16x16xf32>, vector<16x16xf32>, vector<16x16xf32> -> vector<16x16xf32>
    %cst_67 = arith.constant dense<0.000000e+00> : vector<16x16xf32>
    %100 = tpu.matmul %80, %99, %cst_67 {dimension_numbers = #tpu.dot_dimension_numbers<[1], [0], [0], [1], [0, 0, 1, 1], [], []>} : vector<16x16xf32>, vector<16x16xf32>, vector<16x16xf32> -> vector<16x16xf32>
    %c1_68 = arith.constant 1 : index
    %c1_69 = arith.constant 1 : index
    %c0_70 = arith.constant 0 : index
    %c0_71 = arith.constant 0 : index
    %101 = vector.load %arg3[%c1_68, %c1_69, %c0_70, %c0_71] : memref<2x4x16x16xf32, #tpu.memory_space<vmem>>, vector<1x1x16x16xf32>
    %102 = vector.shape_cast %101 : vector<1x1x16x16xf32> to vector<16x16xf32>
    %103 = vector.shape_cast %100 : vector<16x16xf32> to vector<1x1x16x16xf32>
    tpu.vector_store %arg3[%c1_68, %c1_69, %c0_70, %c0_71], %103 {strides = array<i32>} : memref<2x4x16x16xf32, #tpu.memory_space<vmem>>, vector<1x1x16x16xf32>,
    %c1_72 = arith.constant 1 : index
    %c2_73 = arith.constant 2 : index
    %c0_74 = arith.constant 0 : index
    %c0_75 = arith.constant 0 : index
    %104 = vector.load %arg2[%c1_72, %c2_73, %c0_74, %c0_75] : memref<2x4x16x16xf32, #tpu.memory_space<vmem>>, vector<1x1x16x16xf32>
    %105 = vector.shape_cast %104 : vector<1x1x16x16xf32> to vector<16x16xf32>
    %cst_76 = arith.constant dense<0.000000e+00> : vector<16x16xf32>
    %106 = tpu.matmul %105, %89, %cst_76 {dimension_numbers = #tpu.dot_dimension_numbers<[1], [0], [0], [1], [0, 0, 1, 1], [], []>} : vector<16x16xf32>, vector<16x16xf32>, vector<16x16xf32> -> vector<16x16xf32>
    %cst_77 = arith.constant dense<0.000000e+00> : vector<16x16xf32>
    %107 = tpu.matmul %80, %106, %cst_77 {dimension_numbers = #tpu.dot_dimension_numbers<[1], [0], [0], [1], [0, 0, 1, 1], [], []>} : vector<16x16xf32>, vector<16x16xf32>, vector<16x16xf32> -> vector<16x16xf32>
    %c1_78 = arith.constant 1 : index
    %c2_79 = arith.constant 2 : index
    %c0_80 = arith.constant 0 : index
    %c0_81 = arith.constant 0 : index
    %108 = vector.load %arg3[%c1_78, %c2_79, %c0_80, %c0_81] : memref<2x4x16x16xf32, #tpu.memory_space<vmem>>, vector<1x1x16x16xf32>
    %109 = vector.shape_cast %108 : vector<1x1x16x16xf32> to vector<16x16xf32>
    %110 = vector.shape_cast %107 : vector<16x16xf32> to vector<1x1x16x16xf32>
    tpu.vector_store %arg3[%c1_78, %c2_79, %c0_80, %c0_81], %110 {strides = array<i32>} : memref<2x4x16x16xf32, #tpu.memory_space<vmem>>, vector<1x1x16x16xf32>,
    %c1_82 = arith.constant 1 : index
    %c3_83 = arith.constant 3 : index
    %c0_84 = arith.constant 0 : index
    %c0_85 = arith.constant 0 : index
    %111 = vector.load %arg2[%c1_82, %c3_83, %c0_84, %c0_85] : memref<2x4x16x16xf32, #tpu.memory_space<vmem>>, vector<1x1x16x16xf32>
    %112 = vector.shape_cast %111 : vector<1x1x16x16xf32> to vector<16x16xf32>
    %cst_86 = arith.constant dense<0.000000e+00> : vector<16x16xf32>
    %113 = tpu.matmul %112, %89, %cst_86 {dimension_numbers = #tpu.dot_dimension_numbers<[1], [0], [0], [1], [0, 0, 1, 1], [], []>} : vector<16x16xf32>, vector<16x16xf32>, vector<16x16xf32> -> vector<16x16xf32>
    %cst_87 = arith.constant dense<0.000000e+00> : vector<16x16xf32>
    %114 = tpu.matmul %80, %113, %cst_87 {dimension_numbers = #tpu.dot_dimension_numbers<[1], [0], [0], [1], [0, 0, 1, 1], [], []>} : vector<16x16xf32>, vector<16x16xf32>, vector<16x16xf32> -> vector<16x16xf32>
    %c1_88 = arith.constant 1 : index
    %c3_89 = arith.constant 3 : index
    %c0_90 = arith.constant 0 : index
    %c0_91 = arith.constant 0 : index
    %115 = vector.load %arg3[%c1_88, %c3_89, %c0_90, %c0_91] : memref<2x4x16x16xf32, #tpu.memory_space<vmem>>, vector<1x1x16x16xf32>
    %116 = vector.shape_cast %115 : vector<1x1x16x16xf32> to vector<16x16xf32>
    %117 = vector.shape_cast %114 : vector<16x16xf32> to vector<1x1x16x16xf32>
    tpu.vector_store %arg3[%c1_88, %c3_89, %c0_90, %c0_91], %117 {strides = array<i32>} : memref<2x4x16x16xf32, #tpu.memory_space<vmem>>, vector<1x1x16x16xf32>,
    return
  }
  func.func @transform_0(%arg0: i32, %arg1: memref<4xi32, #tpu.memory_space<smem>>) -> (i32, i32, i32, i32) {
    %c0_i32 = arith.constant 0 : i32
    %c0_i32_0 = arith.constant 0 : i32
    %c0_i32_1 = arith.constant 0 : i32
    %c0_i32_2 = arith.constant 0 : i32
    return %arg0, %c0_i32, %c0_i32_0, %c0_i32_1 : i32, i32, i32, i32
  }
  func.func @transform_1(%arg0: i32, %arg1: memref<4xi32, #tpu.memory_space<smem>>) -> (i32, i32, i32, i32) {
    %c0_i32 = arith.constant 0 : i32
    %c0_i32_0 = arith.constant 0 : i32
    %c0_i32_1 = arith.constant 0 : i32
    %c0_i32_2 = arith.constant 0 : i32
    return %arg0, %c0_i32, %c0_i32_0, %c0_i32_1 : i32, i32, i32, i32
  }
}

</mosaic_0001>

<llo_original>
// kernel: tpu_custom_call.1
$region0: #{tpu_custom_call.1}
  #allocation0 [shape = 'u32[]', space=smem, size = 0x4, offset = 0x4, fixed_abs, tag = 'smem constant byte address 0x4 - core index']
  #allocation1 [shape = 'u32[144,128]{1,0:T(1,128)}', space=vmem, size = 0x12000, scoped, tag = 'internal scratch']
  #allocation2 [shape = 's32[1]{0}', space=sflag, size = 0x4, scoped, tag = 'scoped memory for tpu_custom_call.1']
  #allocation3 [shape = 'u8[512]{0}', space=smem, size = 0x200, scoped, tag = 'prefetched SMEM operand 0']
  %s0 = inlined_call_operand.hbm [shape: s32[4], index: 0, kind: input, shape index: {}]
  %s1 = inlined_call_operand.hbm [shape: f32[2,4,16,16], index: 1, kind: input, shape index: {}]
  %s2 = inlined_call_operand.hbm [shape: f32[2,4,16,16], index: 2, kind: output, shape index: {}]
  %s3 = sld [smem:[#allocation0]]
  $region18: #{tpu_custom_call.1} parent=0
    _
  %s5 = ssub.s32 1, %s3
  %s6 = scalar_select 0, %s5, %s3
  %8 = dma.hbm_to_smem %s0, 16, [#allocation3], [#allocation2]
  %9 = dma.done [#allocation2], 16
  %10 = sfence
  $region1: #{tpu_custom_call.1} parent=0
    #allocation4 [shape = 'u8[65536]{0}', space=vmem, size = 0x10000, scoped, tag = 'input window, operand 1, single buffered']
    #allocation5 [shape = 's32[1]{0}', space=sflag, size = 0x4, scoped, tag = 'scoped memory for tpu_custom_call.1']
    #allocation6 [shape = 's32[1]{0}', space=sflag, size = 0x4, scoped, tag = 'scoped memory for tpu_custom_call.1']
    #allocation7 [shape = 'u8[65536]{0}', space=vmem, size = 0x10000, scoped, tag = 'output window, operand 0, single buffered']
    %11 = vsyncpa [#allocation5], 0
    %12 = vsyncpa [#allocation6], 0
    // Predicated region
    $region2: #{tpu_custom_call.1} parent=1 // pred_check
      _
    $region3: #{tpu_custom_call.1} parent=1 // pred_check_branch
      %14 = sbr.rel (0) target = $region5
    $region4: #{tpu_custom_call.1} parent=1 // pred_region
      %s16 = ssub.s32 2048, 2048
      %17 = vsyncadd [#allocation5], %s16
      %s18 = sshll.u32 [#allocation4], 4
      %s19 = int_to_ptr.vmem [resolvable:$true] %s18
      %24 = dma.hbm_to_vmem [thread:$0]  %s1, 2048, %s19, [#allocation5], 128, 128, 8
    $region5: #{tpu_custom_call.1} parent=1 // pred_fallthru
      _
    // Predicated region
    $region6: #{tpu_custom_call.1} parent=1 // pred_check
      _
    $region7: #{tpu_custom_call.1} parent=1 // pred_check_branch
      %26 = sbr.rel (0) target = $region9
    $region8: #{tpu_custom_call.1} parent=1 // pred_region
      %27 = dma.done [#allocation5], 2048
    $region9: #{tpu_custom_call.1} parent=1 // pred_fallthru
      _
    %v28 = vlaneseq
    %v29 = vshrl.u32 %v28, 7
    %v30 = vadd.s32 %v29, 8
    %v31 = vlaneseq
    %v32 = vand.u32 %v31, 127
    %s33 = smul.u32 0, 4
    %s34 = sld [smem:[#allocation3 + %s33]]
    %s35 = ssub.s32 %s34, 4
    %s36 = sadd.s32 %s33, 1
    %s37 = sld [smem:[#allocation3 + %s36]]
    %s38 = ssub.s32 %s37, 4
    %v39 = vstv %s38
    %v40 = vadd.s32 %v29, %v39
    %v41 = vadd.s32 %v30, %v39
    %vm42 = vcmp.gt.s32.totalorder %v40, 0
    %v43 = vsel %vm42, %v40, 0
    %vm44 = vcmp.gt.s32.totalorder %v41, 0
    %v45 = vsel %vm44, %v41, 0
    %vm46 = vcmp.lt.s32.totalorder %v43, 15
    %v47 = vsel %vm46, %v43, 15
    %vm48 = vcmp.lt.s32.totalorder %v45, 15
    %v49 = vsel %vm48, %v45, 15
    %vm50 = vcmp.eq.s32.totalorder %v32, %v47
    %vm51 = vcmp.eq.s32.totalorder %v32, %v49
    %v52 = vsel %vm50, 1, 0
    %v53 = vsel %vm51, 1, 0
    %v54 = vcvt.s32.f32 %v52
    %v55 = vcvt.s32.f32 %v53
    %v56 = vstv %s35
    %v57 = vadd.s32 %v32, %v56
    %vm58 = vcmp.gt.s32.totalorder %v57, 0
    %v59 = vsel %vm58, %v57, 0
    %vm60 = vcmp.lt.s32.totalorder %v59, 15
    %v61 = vsel %vm60, %v59, 15
    %vm62 = vcmp.eq.s32.totalorder %v29, %v61
    %vm63 = vcmp.eq.s32.totalorder %v30, %v61
    %v64 = vsel %vm62, 1, 0
    %v65 = vsel %vm63, 1, 0
    %v66 = vcvt.s32.f32 %v64
    %v67 = vcvt.s32.f32 %v65
    %v68 = vld [vmem:[#allocation4] sm:$0xff]
    %v69 = vld [vmem:[#allocation4 + $0x8] sm:$0xff]
    %vm70 = vcmask 130048
    %v72 = vsel %vm70, %v68, 0
    %v75 = vsel %vm70, %v69, 0
    %77 = vmatprep.subr.mxu0 0.0
    %78 = vmatpush1.msra.mxu0 %v66
    %79 = vmatprep.subr.mxu0 0.0
    %80 = vmatpush1.msra.mxu0 %v67
    %81 = vmatprep.subr.mxu0 0.0
    %82 = vmatpush1.msra.mxu0 0.0
    %83 = vmatprep.subr.mxu0 0.0
    %84 = vmatpush1.msra.mxu0 0.0
    %85 = vmatprep.subr.mxu0 0.0
    %86 = vmatpush1.msra.mxu0 0.0
    %87 = vmatprep.subr.mxu0 0.0
    %88 = vmatpush1.msra.mxu0 0.0
    %89 = vmatprep.subr.mxu0 0.0
    %90 = vmatpush1.msra.mxu0 0.0
    %91 = vmatprep.subr.mxu0 0.0
    %92 = vmatpush1.msra.mxu0 0.0
    %93 = vmatprep.subr.mxu0 0.0
    %94 = vmatpush1.msra.mxu0 0.0
    %95 = vmatprep.subr.mxu0 0.0
    %96 = vmatpush1.msra.mxu0 0.0
    %97 = vmatprep.subr.mxu0 0.0
    %98 = vmatpush1.msra.mxu0 0.0
    %99 = vmatprep.subr.mxu0 0.0
    %100 = vmatpush1.msra.mxu0 0.0
    %101 = vmatprep.subr.mxu0 0.0
    %102 = vmatpush1.msra.mxu0 0.0
    %103 = vmatprep.subr.mxu0 0.0
    %104 = vmatpush1.msra.mxu0 0.0
    %105 = vmatprep.subr.mxu0 0.0
    %106 = vmatpush1.msra.mxu0 0.0
    %107 = vmatprep.subr.mxu0 0.0
    %108 = vmatpush1.msra.mxu0 0.0
    %109 = vmatprep.subr.mxu0 0.0
    %110 = vmatpush1.msra.mxu0 0.0
    %111 = vmatprep.subr.mxu0 0.0
    %112 = vmatpush1.msra.mxu0 0.0
    %113 = vmatprep.subr.mxu0 0.0
    %114 = vmatpush1.msra.mxu0 0.0
    %115 = vmatprep.subr.mxu0 0.0
    %116 = vmatpush1.msra.mxu0 0.0
    %117 = vmatprep.subr.mxu0 0.0
    %118 = vmatpush1.msra.mxu0 0.0
    %119 = vmatprep.subr.mxu0 0.0
    %120 = vmatpush1.msra.mxu0 0.0
    %121 = vmatprep.subr.mxu0 0.0
    %122 = vmatpush1.msra.mxu0 0.0
    %123 = vmatprep.subr.mxu0 0.0
    %124 = vmatpush1.msra.mxu0 0.0
    %125 = vmatprep.subr.mxu0 0.0
    %126 = vmatpush1.msra.mxu0 0.0
    %127 = vmatprep.subr.mxu0 0.0
    %128 = vmatpush1.msra.mxu0 0.0
    %129 = vmatprep.subr.mxu0 0.0
    %130 = vmatpush1.msra.mxu0 0.0
    %131 = vmatprep.subr.mxu0 0.0
    %132 = vmatpush1.msra.mxu0 0.0
    %133 = vmatprep.subr.mxu0 0.0
    %134 = vmatpush1.msra.mxu0 0.0
    %135 = vmatprep.subr.mxu0 0.0
    %136 = vmatpush1.msra.mxu0 0.0
    %137 = vmatprep.subr.mxu0 0.0
    %138 = vmatpush1.msra.mxu0 0.0
    %139 = vmatprep.subr.mxu0 0.0
    %140 = vmatpush1.msra.mxu0 0.0
    %141 = vmatprep.mubr.f32.mxu0 0.0
    %142 = vmatmul.mubr.f32.gmra.mrb[0].mxu0 %v72
    %v143 = vpop.f32.mrb[0].mxu0
    %v144 = vadd.f32 0.0, %v143
    %v145 = vpop.f32.mrb[0].mxu0
    %146 = vmatprep.mubr.f32.mxu0 0.0
    %147 = vmatmul.mubr.f32.gmra.mrb[0].mxu0 %v75
    %v148 = vpop.f32.mrb[0].mxu0
    %v149 = vadd.f32 0.0, %v148
    %v150 = vpop.f32.mrb[0].mxu0
    %151 = vdwg.mxu0
    %v153 = vsel %vm70, %v54, 0
    %v156 = vsel %vm70, %v55, 0
    %158 = vmatprep.subr.mxu0 0.0
    %159 = vmatpush1.msra.mxu0 %v144
    %160 = vmatprep.subr.mxu0 0.0
    %161 = vmatpush1.msra.mxu0 %v149
    %162 = vmatprep.subr.mxu0 0.0
    %163 = vmatpush1.msra.mxu0 0.0
    %164 = vmatprep.subr.mxu0 0.0
    %165 = vmatpush1.msra.mxu0 0.0
    %166 = vmatprep.subr.mxu0 0.0
    %167 = vmatpush1.msra.mxu0 0.0
    %168 = vmatprep.subr.mxu0 0.0
    %169 = vmatpush1.msra.mxu0 0.0
    %170 = vmatprep.subr.mxu0 0.0
    %171 = vmatpush1.msra.mxu0 0.0
    %172 = vmatprep.subr.mxu0 0.0
    %173 = vmatpush1.msra.mxu0 0.0
    %174 = vmatprep.subr.mxu0 0.0
    %175 = vmatpush1.msra.mxu0 0.0
    %176 = vmatprep.subr.mxu0 0.0
    %177 = vmatpush1.msra.mxu0 0.0
    %178 = vmatprep.subr.mxu0 0.0
    %179 = vmatpush1.msra.mxu0 0.0
    %180 = vmatprep.subr.mxu0 0.0
    %181 = vmatpush1.msra.mxu0 0.0
    %182 = vmatprep.subr.mxu0 0.0
    %183 = vmatpush1.msra.mxu0 0.0
    %184 = vmatprep.subr.mxu0 0.0
    %185 = vmatpush1.msra.mxu0 0.0
    %186 = vmatprep.subr.mxu0 0.0
    %187 = vmatpush1.msra.mxu0 0.0
    %188 = vmatprep.subr.mxu0 0.0
    %189 = vmatpush1.msra.mxu0 0.0
    %190 = vmatprep.subr.mxu0 0.0
    %191 = vmatpush1.msra.mxu0 0.0
    %192 = vmatprep.subr.mxu0 0.0
    %193 = vmatpush1.msra.mxu0 0.0
    %194 = vmatprep.subr.mxu0 0.0
    %195 = vmatpush1.msra.mxu0 0.0
    %196 = vmatprep.subr.mxu0 0.0
    %197 = vmatpush1.msra.mxu0 0.0
    %198 = vmatprep.subr.mxu0 0.0
    %199 = vmatpush1.msra.mxu0 0.0
    %200 = vmatprep.subr.mxu0 0.0
    %201 = vmatpush1.msra.mxu0 0.0
    %202 = vmatprep.subr.mxu0 0.0
    %203 = vmatpush1.msra.mxu0 0.0
    %204 = vmatprep.subr.mxu0 0.0
    %205 = vmatpush1.msra.mxu0 0.0
    %206 = vmatprep.subr.mxu0 0.0
    %207 = vmatpush1.msra.mxu0 0.0
    %208 = vmatprep.subr.mxu0 0.0
    %209 = vmatpush1.msra.mxu0 0.0
    %210 = vmatprep.subr.mxu0 0.0
    %211 = vmatpush1.msra.mxu0 0.0
    %212 = vmatprep.subr.mxu0 0.0
    %213 = vmatpush1.msra.mxu0 0.0
    %214 = vmatprep.subr.mxu0 0.0
    %215 = vmatpush1.msra.mxu0 0.0
    %216 = vmatprep.subr.mxu0 0.0
    %217 = vmatpush1.msra.mxu0 0.0
    %218 = vmatprep.subr.mxu0 0.0
    %219 = vmatpush1.msra.mxu0 0.0
    %220 = vmatprep.subr.mxu0 0.0
    %221 = vmatpush1.msra.mxu0 0.0
    %222 = vmatprep.mubr.f32.mxu0 0.0
    %223 = vmatmul.mubr.f32.gmra.mrb[0].mxu0 %v153
    %v224 = vpop.f32.mrb[0].mxu0
    %v225 = vadd.f32 0.0, %v224
    %v226 = vpop.f32.mrb[0].mxu0
    %227 = vmatprep.mubr.f32.mxu0 0.0
    %228 = vmatmul.mubr.f32.gmra.mrb[0].mxu0 %v156
    %v229 = vpop.f32.mrb[0].mxu0
    %v230 = vadd.f32 0.0, %v229
    %v231 = vpop.f32.mrb[0].mxu0
    %232 = vdwg.mxu0
    %233 = vst.msk [vmem:[#allocation7] sm:$0xff] %vm70, %v225
    %234 = vst.msk [vmem:[#allocation7 + $0x8] sm:$0xff] %vm70, %v230
    %s235 = scalar_lea.vmem [#allocation4], 16
    %v236 = vld [vmem:[%s235] sm:$0xff]
    %v237 = vld [vmem:[%s235 + $0x8] sm:$0xff]
    %v239 = vsel %vm70, %v236, 0
    %v242 = vsel %vm70, %v237, 0
    %244 = vmatprep.subr.mxu0 0.0
    %245 = vmatpush1.msra.mxu0 %v66
    %246 = vmatprep.subr.mxu0 0.0
    %247 = vmatpush1.msra.mxu0 %v67
    %248 = vmatprep.subr.mxu0 0.0
    %249 = vmatpush1.msra.mxu0 0.0
    %250 = vmatprep.subr.mxu0 0.0
    %251 = vmatpush1.msra.mxu0 0.0
    %252 = vmatprep.subr.mxu0 0.0
    %253 = vmatpush1.msra.mxu0 0.0
    %254 = vmatprep.subr.mxu0 0.0
    %255 = vmatpush1.msra.mxu0 0.0
    %256 = vmatprep.subr.mxu0 0.0
    %257 = vmatpush1.msra.mxu0 0.0
    %258 = vmatprep.subr.mxu0 0.0
    %259 = vmatpush1.msra.mxu0 0.0
    %260 = vmatprep.subr.mxu0 0.0
    %261 = vmatpush1.msra.mxu0 0.0
    %262 = vmatprep.subr.mxu0 0.0
    %263 = vmatpush1.msra.mxu0 0.0
    %264 = vmatprep.subr.mxu0 0.0
    %265 = vmatpush1.msra.mxu0 0.0
    %266 = vmatprep.subr.mxu0 0.0
    %267 = vmatpush1.msra.mxu0 0.0
    %268 = vmatprep.subr.mxu0 0.0
    %269 = vmatpush1.msra.mxu0 0.0
    %270 = vmatprep.subr.mxu0 0.0
    %271 = vmatpush1.msra.mxu0 0.0
    %272 = vmatprep.subr.mxu0 0.0
    %273 = vmatpush1.msra.mxu0 0.0
    %274 = vmatprep.subr.mxu0 0.0
    %275 = vmatpush1.msra.mxu0 0.0
    %276 = vmatprep.subr.mxu0 0.0
    %277 = vmatpush1.msra.mxu0 0.0
    %278 = vmatprep.subr.mxu0 0.0
    %279 = vmatpush1.msra.mxu0 0.0
    %280 = vmatprep.subr.mxu0 0.0
    %281 = vmatpush1.msra.mxu0 0.0
    %282 = vmatprep.subr.mxu0 0.0
    %283 = vmatpush1.msra.mxu0 0.0
    %284 = vmatprep.subr.mxu0 0.0
    %285 = vmatpush1.msra.mxu0 0.0
    %286 = vmatprep.subr.mxu0 0.0
    %287 = vmatpush1.msra.mxu0 0.0
    %288 = vmatprep.subr.mxu0 0.0
    %289 = vmatpush1.msra.mxu0 0.0
    %290 = vmatprep.subr.mxu0 0.0
    %291 = vmatpush1.msra.mxu0 0.0
    %292 = vmatprep.subr.mxu0 0.0
    %293 = vmatpush1.msra.mxu0 0.0
    %294 = vmatprep.subr.mxu0 0.0
    %295 = vmatpush1.msra.mxu0 0.0
    %296 = vmatprep.subr.mxu0 0.0
    %297 = vmatpush1.msra.mxu0 0.0
    %298 = vmatprep.subr.mxu0 0.0
    %299 = vmatpush1.msra.mxu0 0.0
    %300 = vmatprep.subr.mxu0 0.0
    %301 = vmatpush1.msra.mxu0 0.0
    %302 = vmatprep.subr.mxu0 0.0
    %303 = vmatpush1.msra.mxu0 0.0
    %304 = vmatprep.subr.mxu0 0.0
    %305 = vmatpush1.msra.mxu0 0.0
    %306 = vmatprep.subr.mxu0 0.0
    %307 = vmatpush1.msra.mxu0 0.0
    %308 = vmatprep.mubr.f32.mxu0 0.0
    %309 = vmatmul.mubr.f32.gmra.mrb[0].mxu0 %v239
    %v310 = vpop.f32.mrb[0].mxu0
    %v311 = vadd.f32 0.0, %v310
    %v312 = vpop.f32.mrb[0].mxu0
    %313 = vmatprep.mubr.f32.mxu0 0.0
    %314 = vmatmul.mubr.f32.gmra.mrb[0].mxu0 %v242
    %v315 = vpop.f32.mrb[0].mxu0
    %v316 = vadd.f32 0.0, %v315
    %v317 = vpop.f32.mrb[0].mxu0
    %318 = vdwg.mxu0
    %319 = vmatprep.subr.mxu0 0.0
    %320 = vmatpush1.msra.mxu0 %v311
    %321 = vmatprep.subr.mxu0 0.0
    %322 = vmatpush1.msra.mxu0 %v316
    %323 = vmatprep.subr.mxu0 0.0
    %324 = vmatpush1.msra.mxu0 0.0
    %325 = vmatprep.subr.mxu0 0.0
    %326 = vmatpush1.msra.mxu0 0.0
    %327 = vmatprep.subr.mxu0 0.0
    %328 = vmatpush1.msra.mxu0 0.0
    %329 = vmatprep.subr.mxu0 0.0
    %330 = vmatpush1.msra.mxu0 0.0
    %331 = vmatprep.subr.mxu0 0.0
    %332 = vmatpush1.msra.mxu0 0.0
    %333 = vmatprep.subr.mxu0 0.0
    %334 = vmatpush1.msra.mxu0 0.0
    %335 = vmatprep.subr.mxu0 0.0
    %336 = vmatpush1.msra.mxu0 0.0
    %337 = vmatprep.subr.mxu0 0.0
    %338 = vmatpush1.msra.mxu0 0.0
    %339 = vmatprep.subr.mxu0 0.0
    %340 = vmatpush1.msra.mxu0 0.0
    %341 = vmatprep.subr.mxu0 0.0
    %342 = vmatpush1.msra.mxu0 0.0
    %343 = vmatprep.subr.mxu0 0.0
    %344 = vmatpush1.msra.mxu0 0.0
    %345 = vmatprep.subr.mxu0 0.0
    %346 = vmatpush1.msra.mxu0 0.0
    %347 = vmatprep.subr.mxu0 0.0
    %348 = vmatpush1.msra.mxu0 0.0
    %349 = vmatprep.subr.mxu0 0.0
    %350 = vmatpush1.msra.mxu0 0.0
    %351 = vmatprep.subr.mxu0 0.0
    %352 = vmatpush1.msra.mxu0 0.0
    %353 = vmatprep.subr.mxu0 0.0
    %354 = vmatpush1.msra.mxu0 0.0
    %355 = vmatprep.subr.mxu0 0.0
    %356 = vmatpush1.msra.mxu0 0.0
    %357 = vmatprep.subr.mxu0 0.0
    %358 = vmatpush1.msra.mxu0 0.0
    %359 = vmatprep.subr.mxu0 0.0
    %360 = vmatpush1.msra.mxu0 0.0
    %361 = vmatprep.subr.mxu0 0.0
    %362 = vmatpush1.msra.mxu0 0.0
    %363 = vmatprep.subr.mxu0 0.0
    %364 = vmatpush1.msra.mxu0 0.0
    %365 = vmatprep.subr.mxu0 0.0
    %366 = vmatpush1.msra.mxu0 0.0
    %367 = vmatprep.subr.mxu0 0.0
    %368 = vmatpush1.msra.mxu0 0.0
    %369 = vmatprep.subr.mxu0 0.0
    %370 = vmatpush1.msra.mxu0 0.0
    %371 = vmatprep.subr.mxu0 0.0
    %372 = vmatpush1.msra.mxu0 0.0
    %373 = vmatprep.subr.mxu0 0.0
    %374 = vmatpush1.msra.mxu0 0.0
    %375 = vmatprep.subr.mxu0 0.0
    %376 = vmatpush1.msra.mxu0 0.0
    %377 = vmatprep.subr.mxu0 0.0
    %378 = vmatpush1.msra.mxu0 0.0
    %379 = vmatprep.subr.mxu0 0.0
    %380 = vmatpush1.msra.mxu0 0.0
    %381 = vmatprep.subr.mxu0 0.0
    %382 = vmatpush1.msra.mxu0 0.0
    %383 = vmatprep.mubr.f32.mxu0 0.0
    %384 = vmatmul.mubr.f32.gmra.mrb[0].mxu0 %v153
    %v385 = vpop.f32.mrb[0].mxu0
    %v386 = vadd.f32 0.0, %v385
    %v387 = vpop.f32.mrb[0].mxu0
    %388 = vmatprep.mubr.f32.mxu0 0.0
    %389 = vmatmul.mubr.f32.gmra.mrb[0].mxu0 %v156
    %v390 = vpop.f32.mrb[0].mxu0
    %v391 = vadd.f32 0.0, %v390
    %v392 = vpop.f32.mrb[0].mxu0
    %393 = vdwg.mxu0
    %s394 = scalar_lea.vmem [#allocation7], 16
    %395 = vst.msk [vmem:[%s394] sm:$0xff] %vm70, %v386
    %396 = vst.msk [vmem:[%s394 + $0x8] sm:$0xff] %vm70, %v391
    %s397 = scalar_lea.vmem [#allocation4], 32
    %v398 = vld [vmem:[%s397] sm:$0xff]
    %v399 = vld [vmem:[%s397 + $0x8] sm:$0xff]
    %v401 = vsel %vm70, %v398, 0
    %v404 = vsel %vm70, %v399, 0
    %406 = vmatprep.subr.mxu0 0.0
    %407 = vmatpush1.msra.mxu0 %v66
    %408 = vmatprep.subr.mxu0 0.0
    %409 = vmatpush1.msra.mxu0 %v67
    %410 = vmatprep.subr.mxu0 0.0
    %411 = vmatpush1.msra.mxu0 0.0
    %412 = vmatprep.subr.mxu0 0.0
    %413 = vmatpush1.msra.mxu0 0.0
    %414 = vmatprep.subr.mxu0 0.0
    %415 = vmatpush1.msra.mxu0 0.0
    %416 = vmatprep.subr.mxu0 0.0
    %417 = vmatpush1.msra.mxu0 0.0
    %418 = vmatprep.subr.mxu0 0.0
    %419 = vmatpush1.msra.mxu0 0.0
    %420 = vmatprep.subr.mxu0 0.0
    %421 = vmatpush1.msra.mxu0 0.0
    %422 = vmatprep.subr.mxu0 0.0
    %423 = vmatpush1.msra.mxu0 0.0
    %424 = vmatprep.subr.mxu0 0.0
    %425 = vmatpush1.msra.mxu0 0.0
    %426 = vmatprep.subr.mxu0 0.0
    %427 = vmatpush1.msra.mxu0 0.0
    %428 = vmatprep.subr.mxu0 0.0
    %429 = vmatpush1.msra.mxu0 0.0
    %430 = vmatprep.subr.mxu0 0.0
    %431 = vmatpush1.msra.mxu0 0.0
    %432 = vmatprep.subr.mxu0 0.0
    %433 = vmatpush1.msra.mxu0 0.0
    %434 = vmatprep.subr.mxu0 0.0
    %435 = vmatpush1.msra.mxu0 0.0
    %436 = vmatprep.subr.mxu0 0.0
    %437 = vmatpush1.msra.mxu0 0.0
    %438 = vmatprep.subr.mxu0 0.0
    %439 = vmatpush1.msra.mxu0 0.0
    %440 = vmatprep.subr.mxu0 0.0
    %441 = vmatpush1.msra.mxu0 0.0
    %442 = vmatprep.subr.mxu0 0.0
    %443 = vmatpush1.msra.mxu0 0.0
    %444 = vmatprep.subr.mxu0 0.0
    %445 = vmatpush1.msra.mxu0 0.0
    %446 = vmatprep.subr.mxu0 0.0
    %447 = vmatpush1.msra.mxu0 0.0
    %448 = vmatprep.subr.mxu0 0.0
    %449 = vmatpush1.msra.mxu0 0.0
    %450 = vmatprep.subr.mxu0 0.0
    %451 = vmatpush1.msra.mxu0 0.0
    %452 = vmatprep.subr.mxu0 0.0
    %453 = vmatpush1.msra.mxu0 0.0
    %454 = vmatprep.subr.mxu0 0.0
    %455 = vmatpush1.msra.mxu0 0.0
    %456 = vmatprep.subr.mxu0 0.0
    %457 = vmatpush1.msra.mxu0 0.0
    %458 = vmatprep.subr.mxu0 0.0
    %459 = vmatpush1.msra.mxu0 0.0
    %460 = vmatprep.subr.mxu0 0.0
    %461 = vmatpush1.msra.mxu0 0.0
    %462 = vmatprep.subr.mxu0 0.0
    %463 = vmatpush1.msra.mxu0 0.0
    %464 = vmatprep.subr.mxu0 0.0
    %465 = vmatpush1.msra.mxu0 0.0
    %466 = vmatprep.subr.mxu0 0.0
    %467 = vmatpush1.msra.mxu0 0.0
    %468 = vmatprep.subr.mxu0 0.0
    %469 = vmatpush1.msra.mxu0 0.0
    %470 = vmatprep.mubr.f32.mxu0 0.0
    %471 = vmatmul.mubr.f32.gmra.mrb[0].mxu0 %v401
    %v472 = vpop.f32.mrb[0].mxu0
    %v473 = vadd.f32 0.0, %v472
    %v474 = vpop.f32.mrb[0].mxu0
    %475 = vmatprep.mubr.f32.mxu0 0.0
    %476 = vmatmul.mubr.f32.gmra.mrb[0].mxu0 %v404
    %v477 = vpop.f32.mrb[0].mxu0
    %v478 = vadd.f32 0.0, %v477
    %v479 = vpop.f32.mrb[0].mxu0
    %480 = vdwg.mxu0
    %481 = vmatprep.subr.mxu0 0.0
    %482 = vmatpush1.msra.mxu0 %v473
    %483 = vmatprep.subr.mxu0 0.0
    %484 = vmatpush1.msra.mxu0 %v478
    %485 = vmatprep.subr.mxu0 0.0
    %486 = vmatpush1.msra.mxu0 0.0
    %487 = vmatprep.subr.mxu0 0.0
    %488 = vmatpush1.msra.mxu0 0.0
    %489 = vmatprep.subr.mxu0 0.0
    %490 = vmatpush1.msra.mxu0 0.0
    %491 = vmatprep.subr.mxu0 0.0
    %492 = vmatpush1.msra.mxu0 0.0
    %493 = vmatprep.subr.mxu0 0.0
    %494 = vmatpush1.msra.mxu0 0.0
    %495 = vmatprep.subr.mxu0 0.0
    %496 = vmatpush1.msra.mxu0 0.0
    %497 = vmatprep.subr.mxu0 0.0
    %498 = vmatpush1.msra.mxu0 0.0
    %499 = vmatprep.subr.mxu0 0.0
    %500 = vmatpush1.msra.mxu0 0.0
    %501 = vmatprep.subr.mxu0 0.0
    %502 = vmatpush1.msra.mxu0 0.0
    %503 = vmatprep.subr.mxu0 0.0
    %504 = vmatpush1.msra.mxu0 0.0
    %505 = vmatprep.subr.mxu0 0.0
    %506 = vmatpush1.msra.mxu0 0.0
    %507 = vmatprep.subr.mxu0 0.0
    %508 = vmatpush1.msra.mxu0 0.0
    %509 = vmatprep.subr.mxu0 0.0
    %510 = vmatpush1.msra.mxu0 0.0
    %511 = vmatprep.subr.mxu0 0.0
    %512 = vmatpush1.msra.mxu0 0.0
    %513 = vmatprep.subr.mxu0 0.0
    %514 = vmatpush1.msra.mxu0 0.0
    %515 = vmatprep.subr.mxu0 0.0
    %516 = vmatpush1.msra.mxu0 0.0
    %517 = vmatprep.subr.mxu0 0.0
    %518 = vmatpush1.msra.mxu0 0.0
    %519 = vmatprep.subr.mxu0 0.0
    %520 = vmatpush1.msra.mxu0 0.0
    %521 = vmatprep.subr.mxu0 0.0
    %522 = vmatpush1.msra.mxu0 0.0
    %523 = vmatprep.subr.mxu0 0.0
    %524 = vmatpush1.msra.mxu0 0.0
    %525 = vmatprep.subr.mxu0 0.0
    %526 = vmatpush1.msra.mxu0 0.0
    %527 = vmatprep.subr.mxu0 0.0
    %528 = vmatpush1.msra.mxu0 0.0
    %529 = vmatprep.subr.mxu0 0.0
    %530 = vmatpush1.msra.mxu0 0.0
    %531 = vmatprep.subr.mxu0 0.0
    %532 = vmatpush1.msra.mxu0 0.0
    %533 = vmatprep.subr.mxu0 0.0
    %534 = vmatpush1.msra.mxu0 0.0
    %535 = vmatprep.subr.mxu0 0.0
    %536 = vmatpush1.msra.mxu0 0.0
    %537 = vmatprep.subr.mxu0 0.0
    %538 = vmatpush1.msra.mxu0 0.0
    %539 = vmatprep.subr.mxu0 0.0
    %540 = vmatpush1.msra.mxu0 0.0
    %541 = vmatprep.subr.mxu0 0.0
    %542 = vmatpush1.msra.mxu0 0.0
    %543 = vmatprep.subr.mxu0 0.0
    %544 = vmatpush1.msra.mxu0 0.0
    %545 = vmatprep.mubr.f32.mxu0 0.0
    %546 = vmatmul.mubr.f32.gmra.mrb[0].mxu0 %v153
    %v547 = vpop.f32.mrb[0].mxu0
    %v548 = vadd.f32 0.0, %v547
    %v549 = vpop.f32.mrb[0].mxu0
    %550 = vmatprep.mubr.f32.mxu0 0.0
    %551 = vmatmul.mubr.f32.gmra.mrb[0].mxu0 %v156
    %v552 = vpop.f32.mrb[0].mxu0
    %v553 = vadd.f32 0.0, %v552
    %v554 = vpop.f32.mrb[0].mxu0
    %555 = vdwg.mxu0
    %s556 = scalar_lea.vmem [#allocation7], 32
    %557 = vst.msk [vmem:[%s556] sm:$0xff] %vm70, %v548
    %558 = vst.msk [vmem:[%s556 + $0x8] sm:$0xff] %vm70, %v553
    %s559 = scalar_lea.vmem [#allocation4], 48
    %v560 = vld [vmem:[%s559] sm:$0xff]
    %v561 = vld [vmem:[%s559 + $0x8] sm:$0xff]
    %v563 = vsel %vm70, %v560, 0
    %v566 = vsel %vm70, %v561, 0
    %568 = vmatprep.subr.mxu0 0.0
    %569 = vmatpush1.msra.mxu0 %v66
    %570 = vmatprep.subr.mxu0 0.0
    %571 = vmatpush1.msra.mxu0 %v67
    %572 = vmatprep.subr.mxu0 0.0
    %573 = vmatpush1.msra.mxu0 0.0
    %574 = vmatprep.subr.mxu0 0.0
    %575 = vmatpush1.msra.mxu0 0.0
    %576 = vmatprep.subr.mxu0 0.0
    %577 = vmatpush1.msra.mxu0 0.0
    %578 = vmatprep.subr.mxu0 0.0
    %579 = vmatpush1.msra.mxu0 0.0
    %580 = vmatprep.subr.mxu0 0.0
    %581 = vmatpush1.msra.mxu0 0.0
    %582 = vmatprep.subr.mxu0 0.0
    %583 = vmatpush1.msra.mxu0 0.0
    %584 = vmatprep.subr.mxu0 0.0
    %585 = vmatpush1.msra.mxu0 0.0
    %586 = vmatprep.subr.mxu0 0.0
    %587 = vmatpush1.msra.mxu0 0.0
    %588 = vmatprep.subr.mxu0 0.0
    %589 = vmatpush1.msra.mxu0 0.0
    %590 = vmatprep.subr.mxu0 0.0
    %591 = vmatpush1.msra.mxu0 0.0
    %592 = vmatprep.subr.mxu0 0.0
    %593 = vmatpush1.msra.mxu0 0.0
    %594 = vmatprep.subr.mxu0 0.0
    %595 = vmatpush1.msra.mxu0 0.0
    %596 = vmatprep.subr.mxu0 0.0
    %597 = vmatpush1.msra.mxu0 0.0
    %598 = vmatprep.subr.mxu0 0.0
    %599 = vmatpush1.msra.mxu0 0.0
    %600 = vmatprep.subr.mxu0 0.0
    %601 = vmatpush1.msra.mxu0 0.0
    %602 = vmatprep.subr.mxu0 0.0
    %603 = vmatpush1.msra.mxu0 0.0
    %604 = vmatprep.subr.mxu0 0.0
    %605 = vmatpush1.msra.mxu0 0.0
    %606 = vmatprep.subr.mxu0 0.0
    %607 = vmatpush1.msra.mxu0 0.0
    %608 = vmatprep.subr.mxu0 0.0
    %609 = vmatpush1.msra.mxu0 0.0
    %610 = vmatprep.subr.mxu0 0.0
    %611 = vmatpush1.msra.mxu0 0.0
    %612 = vmatprep.subr.mxu0 0.0
    %613 = vmatpush1.msra.mxu0 0.0
    %614 = vmatprep.subr.mxu0 0.0
    %615 = vmatpush1.msra.mxu0 0.0
    %616 = vmatprep.subr.mxu0 0.0
    %617 = vmatpush1.msra.mxu0 0.0
    %618 = vmatprep.subr.mxu0 0.0
    %619 = vmatpush1.msra.mxu0 0.0
    %620 = vmatprep.subr.mxu0 0.0
    %621 = vmatpush1.msra.mxu0 0.0
    %622 = vmatprep.subr.mxu0 0.0
    %623 = vmatpush1.msra.mxu0 0.0
    %624 = vmatprep.subr.mxu0 0.0
    %625 = vmatpush1.msra.mxu0 0.0
    %626 = vmatprep.subr.mxu0 0.0
    %627 = vmatpush1.msra.mxu0 0.0
    %628 = vmatprep.subr.mxu0 0.0
    %629 = vmatpush1.msra.mxu0 0.0
    %630 = vmatprep.subr.mxu0 0.0
    %631 = vmatpush1.msra.mxu0 0.0
    %632 = vmatprep.mubr.f32.mxu0 0.0
    %633 = vmatmul.mubr.f32.gmra.mrb[0].mxu0 %v563
    %v634 = vpop.f32.mrb[0].mxu0
    %v635 = vadd.f32 0.0, %v634
    %v636 = vpop.f32.mrb[0].mxu0
    %637 = vmatprep.mubr.f32.mxu0 0.0
    %638 = vmatmul.mubr.f32.gmra.mrb[0].mxu0 %v566
    %v639 = vpop.f32.mrb[0].mxu0
    %v640 = vadd.f32 0.0, %v639
    %v641 = vpop.f32.mrb[0].mxu0
    %642 = vdwg.mxu0
    %643 = vmatprep.subr.mxu0 0.0
    %644 = vmatpush1.msra.mxu0 %v635
    %645 = vmatprep.subr.mxu0 0.0
    %646 = vmatpush1.msra.mxu0 %v640
    %647 = vmatprep.subr.mxu0 0.0
    %648 = vmatpush1.msra.mxu0 0.0
    %649 = vmatprep.subr.mxu0 0.0
    %650 = vmatpush1.msra.mxu0 0.0
    %651 = vmatprep.subr.mxu0 0.0
    %652 = vmatpush1.msra.mxu0 0.0
    %653 = vmatprep.subr.mxu0 0.0
    %654 = vmatpush1.msra.mxu0 0.0
    %655 = vmatprep.subr.mxu0 0.0
    %656 = vmatpush1.msra.mxu0 0.0
    %657 = vmatprep.subr.mxu0 0.0
    %658 = vmatpush1.msra.mxu0 0.0
    %659 = vmatprep.subr.mxu0 0.0
    %660 = vmatpush1.msra.mxu0 0.0
    %661 = vmatprep.subr.mxu0 0.0
    %662 = vmatpush1.msra.mxu0 0.0
    %663 = vmatprep.subr.mxu0 0.0
    %664 = vmatpush1.msra.mxu0 0.0
    %665 = vmatprep.subr.mxu0 0.0
    %666 = vmatpush1.msra.mxu0 0.0
    %667 = vmatprep.subr.mxu0 0.0
    %668 = vmatpush1.msra.mxu0 0.0
    %669 = vmatprep.subr.mxu0 0.0
    %670 = vmatpush1.msra.mxu0 0.0
    %671 = vmatprep.subr.mxu0 0.0
    %672 = vmatpush1.msra.mxu0 0.0
    %673 = vmatprep.subr.mxu0 0.0
    %674 = vmatpush1.msra.mxu0 0.0
    %675 = vmatprep.subr.mxu0 0.0
    %676 = vmatpush1.msra.mxu0 0.0
    %677 = vmatprep.subr.mxu0 0.0
    %678 = vmatpush1.msra.mxu0 0.0
    %679 = vmatprep.subr.mxu0 0.0
    %680 = vmatpush1.msra.mxu0 0.0
    %681 = vmatprep.subr.mxu0 0.0
    %682 = vmatpush1.msra.mxu0 0.0
    %683 = vmatprep.subr.mxu0 0.0
    %684 = vmatpush1.msra.mxu0 0.0
    %685 = vmatprep.subr.mxu0 0.0
    %686 = vmatpush1.msra.mxu0 0.0
    %687 = vmatprep.subr.mxu0 0.0
    %688 = vmatpush1.msra.mxu0 0.0
    %689 = vmatprep.subr.mxu0 0.0
    %690 = vmatpush1.msra.mxu0 0.0
    %691 = vmatprep.subr.mxu0 0.0
    %692 = vmatpush1.msra.mxu0 0.0
    %693 = vmatprep.subr.mxu0 0.0
    %694 = vmatpush1.msra.mxu0 0.0
    %695 = vmatprep.subr.mxu0 0.0
    %696 = vmatpush1.msra.mxu0 0.0
    %697 = vmatprep.subr.mxu0 0.0
    %698 = vmatpush1.msra.mxu0 0.0
    %699 = vmatprep.subr.mxu0 0.0
    %700 = vmatpush1.msra.mxu0 0.0
    %701 = vmatprep.subr.mxu0 0.0
    %702 = vmatpush1.msra.mxu0 0.0
    %703 = vmatprep.subr.mxu0 0.0
    %704 = vmatpush1.msra.mxu0 0.0
    %705 = vmatprep.subr.mxu0 0.0
    %706 = vmatpush1.msra.mxu0 0.0
    %707 = vmatprep.mubr.f32.mxu0 0.0
    %708 = vmatmul.mubr.f32.gmra.mrb[0].mxu0 %v153
    %v709 = vpop.f32.mrb[0].mxu0
    %v710 = vadd.f32 0.0, %v709
    %v711 = vpop.f32.mrb[0].mxu0
    %712 = vmatprep.mubr.f32.mxu0 0.0
    %713 = vmatmul.mubr.f32.gmra.mrb[0].mxu0 %v156
    %v714 = vpop.f32.mrb[0].mxu0
    %v715 = vadd.f32 0.0, %v714
    %v716 = vpop.f32.mrb[0].mxu0
    %717 = vdwg.mxu0
    %s718 = scalar_lea.vmem [#allocation7], 48
    %719 = vst.msk [vmem:[%s718] sm:$0xff] %vm70, %v710
    %720 = vst.msk [vmem:[%s718 + $0x8] sm:$0xff] %vm70, %v715
    %s721 = smul.u32 0, 2
    %s722 = sadd.s32 %s721, 1
    %s723 = smul.u32 %s722, 2
    %s724 = sld [smem:[#allocation3 + %s723]]
    %s725 = ssub.s32 %s724, 4
    %s726 = sadd.s32 %s723, 1
    %s727 = sld [smem:[#allocation3 + %s726]]
    %s728 = ssub.s32 %s727, 4
    %v729 = vstv %s728
    %v730 = vadd.s32 %v29, %v729
    %v731 = vadd.s32 %v30, %v729
    %vm732 = vcmp.gt.s32.totalorder %v730, 0
    %v733 = vsel %vm732, %v730, 0
    %vm734 = vcmp.gt.s32.totalorder %v731, 0
    %v735 = vsel %vm734, %v731, 0
    %vm736 = vcmp.lt.s32.totalorder %v733, 15
    %v737 = vsel %vm736, %v733, 15
    %vm738 = vcmp.lt.s32.totalorder %v735, 15
    %v739 = vsel %vm738, %v735, 15
    %vm740 = vcmp.eq.s32.totalorder %v32, %v737
    %vm741 = vcmp.eq.s32.totalorder %v32, %v739
    %v742 = vsel %vm740, 1, 0
    %v743 = vsel %vm741, 1, 0
    %v744 = vcvt.s32.f32 %v742
    %v745 = vcvt.s32.f32 %v743
    %v746 = vstv %s725
    %v747 = vadd.s32 %v32, %v746
    %vm748 = vcmp.gt.s32.totalorder %v747, 0
    %v749 = vsel %vm748, %v747, 0
    %vm750 = vcmp.lt.s32.totalorder %v749, 15
    %v751 = vsel %vm750, %v749, 15
    %vm752 = vcmp.eq.s32.totalorder %v29, %v751
    %vm753 = vcmp.eq.s32.totalorder %v30, %v751
    %v754 = vsel %vm752, 1, 0
    %v755 = vsel %vm753, 1, 0
    %v756 = vcvt.s32.f32 %v754
    %v757 = vcvt.s32.f32 %v755
    %s758 = scalar_lea.vmem [#allocation4], 64
    %v759 = vld [vmem:[%s758] sm:$0xff]
    %v760 = vld [vmem:[%s758 + $0x8] sm:$0xff]
    %v762 = vsel %vm70, %v759, 0
    %v765 = vsel %vm70, %v760, 0
    %767 = vmatprep.subr.mxu0 0.0
    %768 = vmatpush1.msra.mxu0 %v756
    %769 = vmatprep.subr.mxu0 0.0
    %770 = vmatpush1.msra.mxu0 %v757
    %771 = vmatprep.subr.mxu0 0.0
    %772 = vmatpush1.msra.mxu0 0.0
    %773 = vmatprep.subr.mxu0 0.0
    %774 = vmatpush1.msra.mxu0 0.0
    %775 = vmatprep.subr.mxu0 0.0
    %776 = vmatpush1.msra.mxu0 0.0
    %777 = vmatprep.subr.mxu0 0.0
    %778 = vmatpush1.msra.mxu0 0.0
    %779 = vmatprep.subr.mxu0 0.0
    %780 = vmatpush1.msra.mxu0 0.0
    %781 = vmatprep.subr.mxu0 0.0
    %782 = vmatpush1.msra.mxu0 0.0
    %783 = vmatprep.subr.mxu0 0.0
    %784 = vmatpush1.msra.mxu0 0.0
    %785 = vmatprep.subr.mxu0 0.0
    %786 = vmatpush1.msra.mxu0 0.0
    %787 = vmatprep.subr.mxu0 0.0
    %788 = vmatpush1.msra.mxu0 0.0
    %789 = vmatprep.subr.mxu0 0.0
    %790 = vmatpush1.msra.mxu0 0.0
    %791 = vmatprep.subr.mxu0 0.0
    %792 = vmatpush1.msra.mxu0 0.0
    %793 = vmatprep.subr.mxu0 0.0
    %794 = vmatpush1.msra.mxu0 0.0
    %795 = vmatprep.subr.mxu0 0.0
    %796 = vmatpush1.msra.mxu0 0.0
    %797 = vmatprep.subr.mxu0 0.0
    %798 = vmatpush1.msra.mxu0 0.0
    %799 = vmatprep.subr.mxu0 0.0
    %800 = vmatpush1.msra.mxu0 0.0
    %801 = vmatprep.subr.mxu0 0.0
    %802 = vmatpush1.msra.mxu0 0.0
    %803 = vmatprep.subr.mxu0 0.0
    %804 = vmatpush1.msra.mxu0 0.0
    %805 = vmatprep.subr.mxu0 0.0
    %806 = vmatpush1.msra.mxu0 0.0
    %807 = vmatprep.subr.mxu0 0.0
    %808 = vmatpush1.msra.mxu0 0.0
    %809 = vmatprep.subr.mxu0 0.0
    %810 = vmatpush1.msra.mxu0 0.0
    %811 = vmatprep.subr.mxu0 0.0
    %812 = vmatpush1.msra.mxu0 0.0
    %813 = vmatprep.subr.mxu0 0.0
    %814 = vmatpush1.msra.mxu0 0.0
    %815 = vmatprep.subr.mxu0 0.0
    %816 = vmatpush1.msra.mxu0 0.0
    %817 = vmatprep.subr.mxu0 0.0
    %818 = vmatpush1.msra.mxu0 0.0
    %819 = vmatprep.subr.mxu0 0.0
    %820 = vmatpush1.msra.mxu0 0.0
    %821 = vmatprep.subr.mxu0 0.0
    %822 = vmatpush1.msra.mxu0 0.0
    %823 = vmatprep.subr.mxu0 0.0
    %824 = vmatpush1.msra.mxu0 0.0
    %825 = vmatprep.subr.mxu0 0.0
    %826 = vmatpush1.msra.mxu0 0.0
    %827 = vmatprep.subr.mxu0 0.0
    %828 = vmatpush1.msra.mxu0 0.0
    %829 = vmatprep.subr.mxu0 0.0
    %830 = vmatpush1.msra.mxu0 0.0
    %831 = vmatprep.mubr.f32.mxu0 0.0
    %832 = vmatmul.mubr.f32.gmra.mrb[0].mxu0 %v762
    %v833 = vpop.f32.mrb[0].mxu0
    %v834 = vadd.f32 0.0, %v833
    %v835 = vpop.f32.mrb[0].mxu0
    %836 = vmatprep.mubr.f32.mxu0 0.0
    %837 = vmatmul.mubr.f32.gmra.mrb[0].mxu0 %v765
    %v838 = vpop.f32.mrb[0].mxu0
    %v839 = vadd.f32 0.0, %v838
    %v840 = vpop.f32.mrb[0].mxu0
    %841 = vdwg.mxu0
    %v843 = vsel %vm70, %v744, 0
    %v846 = vsel %vm70, %v745, 0
    %848 = vmatprep.subr.mxu0 0.0
    %849 = vmatpush1.msra.mxu0 %v834
    %850 = vmatprep.subr.mxu0 0.0
    %851 = vmatpush1.msra.mxu0 %v839
    %852 = vmatprep.subr.mxu0 0.0
    %853 = vmatpush1.msra.mxu0 0.0
    %854 = vmatprep.subr.mxu0 0.0
    %855 = vmatpush1.msra.mxu0 0.0
    %856 = vmatprep.subr.mxu0 0.0
    %857 = vmatpush1.msra.mxu0 0.0
    %858 = vmatprep.subr.mxu0 0.0
    %859 = vmatpush1.msra.mxu0 0.0
    %860 = vmatprep.subr.mxu0 0.0
    %861 = vmatpush1.msra.mxu0 0.0
    %862 = vmatprep.subr.mxu0 0.0
    %863 = vmatpush1.msra.mxu0 0.0
    %864 = vmatprep.subr.mxu0 0.0
    %865 = vmatpush1.msra.mxu0 0.0
    %866 = vmatprep.subr.mxu0 0.0
    %867 = vmatpush1.msra.mxu0 0.0
    %868 = vmatprep.subr.mxu0 0.0
    %869 = vmatpush1.msra.mxu0 0.0
    %870 = vmatprep.subr.mxu0 0.0
    %871 = vmatpush1.msra.mxu0 0.0
    %872 = vmatprep.subr.mxu0 0.0
    %873 = vmatpush1.msra.mxu0 0.0
    %874 = vmatprep.subr.mxu0 0.0
    %875 = vmatpush1.msra.mxu0 0.0
    %876 = vmatprep.subr.mxu0 0.0
    %877 = vmatpush1.msra.mxu0 0.0
    %878 = vmatprep.subr.mxu0 0.0
    %879 = vmatpush1.msra.mxu0 0.0
    %880 = vmatprep.subr.mxu0 0.0
    %881 = vmatpush1.msra.mxu0 0.0
    %882 = vmatprep.subr.mxu0 0.0
    %883 = vmatpush1.msra.mxu0 0.0
    %884 = vmatprep.subr.mxu0 0.0
    %885 = vmatpush1.msra.mxu0 0.0
    %886 = vmatprep.subr.mxu0 0.0
    %887 = vmatpush1.msra.mxu0 0.0
    %888 = vmatprep.subr.mxu0 0.0
    %889 = vmatpush1.msra.mxu0 0.0
    %890 = vmatprep.subr.mxu0 0.0
    %891 = vmatpush1.msra.mxu0 0.0
    %892 = vmatprep.subr.mxu0 0.0
    %893 = vmatpush1.msra.mxu0 0.0
    %894 = vmatprep.subr.mxu0 0.0
    %895 = vmatpush1.msra.mxu0 0.0
    %896 = vmatprep.subr.mxu0 0.0
    %897 = vmatpush1.msra.mxu0 0.0
    %898 = vmatprep.subr.mxu0 0.0
    %899 = vmatpush1.msra.mxu0 0.0
    %900 = vmatprep.subr.mxu0 0.0
    %901 = vmatpush1.msra.mxu0 0.0
    %902 = vmatprep.subr.mxu0 0.0
    %903 = vmatpush1.msra.mxu0 0.0
    %904 = vmatprep.subr.mxu0 0.0
    %905 = vmatpush1.msra.mxu0 0.0
    %906 = vmatprep.subr.mxu0 0.0
    %907 = vmatpush1.msra.mxu0 0.0
    %908 = vmatprep.subr.mxu0 0.0
    %909 = vmatpush1.msra.mxu0 0.0
    %910 = vmatprep.subr.mxu0 0.0
    %911 = vmatpush1.msra.mxu0 0.0
    %912 = vmatprep.mubr.f32.mxu0 0.0
    %913 = vmatmul.mubr.f32.gmra.mrb[0].mxu0 %v843
    %v914 = vpop.f32.mrb[0].mxu0
    %v915 = vadd.f32 0.0, %v914
    %v916 = vpop.f32.mrb[0].mxu0
    %917 = vmatprep.mubr.f32.mxu0 0.0
    %918 = vmatmul.mubr.f32.gmra.mrb[0].mxu0 %v846
    %v919 = vpop.f32.mrb[0].mxu0
    %v920 = vadd.f32 0.0, %v919
    %v921 = vpop.f32.mrb[0].mxu0
    %922 = vdwg.mxu0
    %s923 = scalar_lea.vmem [#allocation7], 64
    %924 = vst.msk [vmem:[%s923] sm:$0xff] %vm70, %v915
    %925 = vst.msk [vmem:[%s923 + $0x8] sm:$0xff] %vm70, %v920
    %s926 = scalar_lea.vmem [#allocation4], 80
    %v927 = vld [vmem:[%s926] sm:$0xff]
    %v928 = vld [vmem:[%s926 + $0x8] sm:$0xff]
    %v930 = vsel %vm70, %v927, 0
    %v933 = vsel %vm70, %v928, 0
    %935 = vmatprep.subr.mxu0 0.0
    %936 = vmatpush1.msra.mxu0 %v756
    %937 = vmatprep.subr.mxu0 0.0
    %938 = vmatpush1.msra.mxu0 %v757
    %939 = vmatprep.subr.mxu0 0.0
    %940 = vmatpush1.msra.mxu0 0.0
    %941 = vmatprep.subr.mxu0 0.0
    %942 = vmatpush1.msra.mxu0 0.0
    %943 = vmatprep.subr.mxu0 0.0
    %944 = vmatpush1.msra.mxu0 0.0
    %945 = vmatprep.subr.mxu0 0.0
    %946 = vmatpush1.msra.mxu0 0.0
    %947 = vmatprep.subr.mxu0 0.0
    %948 = vmatpush1.msra.mxu0 0.0
    %949 = vmatprep.subr.mxu0 0.0
    %950 = vmatpush1.msra.mxu0 0.0
    %951 = vmatprep.subr.mxu0 0.0
    %952 = vmatpush1.msra.mxu0 0.0
    %953 = vmatprep.subr.mxu0 0.0
    %954 = vmatpush1.msra.mxu0 0.0
    %955 = vmatprep.subr.mxu0 0.0
    %956 = vmatpush1.msra.mxu0 0.0
    %957 = vmatprep.subr.mxu0 0.0
    %958 = vmatpush1.msra.mxu0 0.0
    %959 = vmatprep.subr.mxu0 0.0
    %960 = vmatpush1.msra.mxu0 0.0
    %961 = vmatprep.subr.mxu0 0.0
    %962 = vmatpush1.msra.mxu0 0.0
    %963 = vmatprep.subr.mxu0 0.0
    %964 = vmatpush1.msra.mxu0 0.0
    %965 = vmatprep.subr.mxu0 0.0
    %966 = vmatpush1.msra.mxu0 0.0
    %967 = vmatprep.subr.mxu0 0.0
    %968 = vmatpush1.msra.mxu0 0.0
    %969 = vmatprep.subr.mxu0 0.0
    %970 = vmatpush1.msra.mxu0 0.0
    %971 = vmatprep.subr.mxu0 0.0
    %972 = vmatpush1.msra.mxu0 0.0
    %973 = vmatprep.subr.mxu0 0.0
    %974 = vmatpush1.msra.mxu0 0.0
    %975 = vmatprep.subr.mxu0 0.0
    %976 = vmatpush1.msra.mxu0 0.0
    %977 = vmatprep.subr.mxu0 0.0
    %978 = vmatpush1.msra.mxu0 0.0
    %979 = vmatprep.subr.mxu0 0.0
    %980 = vmatpush1.msra.mxu0 0.0
    %981 = vmatprep.subr.mxu0 0.0
    %982 = vmatpush1.msra.mxu0 0.0
    %983 = vmatprep.subr.mxu0 0.0
    %984 = vmatpush1.msra.mxu0 0.0
    %985 = vmatprep.subr.mxu0 0.0
    %986 = vmatpush1.msra.mxu0 0.0
    %987 = vmatprep.subr.mxu0 0.0
    %988 = vmatpush1.msra.mxu0 0.0
    %989 = vmatprep.subr.mxu0 0.0
    %990 = vmatpush1.msra.mxu0 0.0
    %991 = vmatprep.subr.mxu0 0.0
    %992 = vmatpush1.msra.mxu0 0.0
    %993 = vmatprep.subr.mxu0 0.0
    %994 = vmatpush1.msra.mxu0 0.0
    %995 = vmatprep.subr.mxu0 0.0
    %996 = vmatpush1.msra.mxu0 0.0
    %997 = vmatprep.subr.mxu0 0.0
    %998 = vmatpush1.msra.mxu0 0.0
    %999 = vmatprep.mubr.f32.mxu0 0.0
    %1000 = vmatmul.mubr.f32.gmra.mrb[0].mxu0 %v930
    %v1001 = vpop.f32.mrb[0].mxu0
    %v1002 = vadd.f32 0.0, %v1001
    %v1003 = vpop.f32.mrb[0].mxu0
    %1004 = vmatprep.mubr.f32.mxu0 0.0
    %1005 = vmatmul.mubr.f32.gmra.mrb[0].mxu0 %v933
    %v1006 = vpop.f32.mrb[0].mxu0
    %v1007 = vadd.f32 0.0, %v1006
    %v1008 = vpop.f32.mrb[0].mxu0
    %1009 = vdwg.mxu0
    %1010 = vmatprep.subr.mxu0 0.0
    %1011 = vmatpush1.msra.mxu0 %v1002
    %1012 = vmatprep.subr.mxu0 0.0
    %1013 = vmatpush1.msra.mxu0 %v1007
    %1014 = vmatprep.subr.mxu0 0.0
    %1015 = vmatpush1.msra.mxu0 0.0
    %1016 = vmatprep.subr.mxu0 0.0
    %1017 = vmatpush1.msra.mxu0 0.0
    %1018 = vmatprep.subr.mxu0 0.0
    %1019 = vmatpush1.msra.mxu0 0.0
    %1020 = vmatprep.subr.mxu0 0.0
    %1021 = vmatpush1.msra.mxu0 0.0
    %1022 = vmatprep.subr.mxu0 0.0
    %1023 = vmatpush1.msra.mxu0 0.0
    %1024 = vmatprep.subr.mxu0 0.0
    %1025 = vmatpush1.msra.mxu0 0.0
    %1026 = vmatprep.subr.mxu0 0.0
    %1027 = vmatpush1.msra.mxu0 0.0
    %1028 = vmatprep.subr.mxu0 0.0
    %1029 = vmatpush1.msra.mxu0 0.0
    %1030 = vmatprep.subr.mxu0 0.0
    %1031 = vmatpush1.msra.mxu0 0.0
    %1032 = vmatprep.subr.mxu0 0.0
    %1033 = vmatpush1.msra.mxu0 0.0
    %1034 = vmatprep.subr.mxu0 0.0
    %1035 = vmatpush1.msra.mxu0 0.0
    %1036 = vmatprep.subr.mxu0 0.0
    %1037 = vmatpush1.msra.mxu0 0.0
    %1038 = vmatprep.subr.mxu0 0.0
    %1039 = vmatpush1.msra.mxu0 0.0
    %1040 = vmatprep.subr.mxu0 0.0
    %1041 = vmatpush1.msra.mxu0 0.0
    %1042 = vmatprep.subr.mxu0 0.0
    %1043 = vmatpush1.msra.mxu0 0.0
    %1044 = vmatprep.subr.mxu0 0.0
    %1045 = vmatpush1.msra.mxu0 0.0
    %1046 = vmatprep.subr.mxu0 0.0
    %1047 = vmatpush1.msra.mxu0 0.0
    %1048 = vmatprep.subr.mxu0 0.0
    %1049 = vmatpush1.msra.mxu0 0.0
    %1050 = vmatprep.subr.mxu0 0.0
    %1051 = vmatpush1.msra.mxu0 0.0
    %1052 = vmatprep.subr.mxu0 0.0
    %1053 = vmatpush1.msra.mxu0 0.0
    %1054 = vmatprep.subr.mxu0 0.0
    %1055 = vmatpush1.msra.mxu0 0.0
    %1056 = vmatprep.subr.mxu0 0.0
    %1057 = vmatpush1.msra.mxu0 0.0
    %1058 = vmatprep.subr.mxu0 0.0
    %1059 = vmatpush1.msra.mxu0 0.0
    %1060 = vmatprep.subr.mxu0 0.0
    %1061 = vmatpush1.msra.mxu0 0.0
    %1062 = vmatprep.subr.mxu0 0.0
    %1063 = vmatpush1.msra.mxu0 0.0
    %1064 = vmatprep.subr.mxu0 0.0
    %1065 = vmatpush1.msra.mxu0 0.0
    %1066 = vmatprep.subr.mxu0 0.0
    %1067 = vmatpush1.msra.mxu0 0.0
    %1068 = vmatprep.subr.mxu0 0.0
    %1069 = vmatpush1.msra.mxu0 0.0
    %1070 = vmatprep.subr.mxu0 0.0
    %1071 = vmatpush1.msra.mxu0 0.0
    %1072 = vmatprep.subr.mxu0 0.0
    %1073 = vmatpush1.msra.mxu0 0.0
    %1074 = vmatprep.mubr.f32.mxu0 0.0
    %1075 = vmatmul.mubr.f32.gmra.mrb[0].mxu0 %v843
    %v1076 = vpop.f32.mrb[0].mxu0
    %v1077 = vadd.f32 0.0, %v1076
    %v1078 = vpop.f32.mrb[0].mxu0
    %1079 = vmatprep.mubr.f32.mxu0 0.0
    %1080 = vmatmul.mubr.f32.gmra.mrb[0].mxu0 %v846
    %v1081 = vpop.f32.mrb[0].mxu0
    %v1082 = vadd.f32 0.0, %v1081
    %v1083 = vpop.f32.mrb[0].mxu0
    %1084 = vdwg.mxu0
    %s1085 = scalar_lea.vmem [#allocation7], 80
    %1086 = vst.msk [vmem:[%s1085] sm:$0xff] %vm70, %v1077
    %1087 = vst.msk [vmem:[%s1085 + $0x8] sm:$0xff] %vm70, %v1082
    %s1088 = scalar_lea.vmem [#allocation4], 96
    %v1089 = vld [vmem:[%s1088] sm:$0xff]
    %v1090 = vld [vmem:[%s1088 + $0x8] sm:$0xff]
    %v1092 = vsel %vm70, %v1089, 0
    %v1095 = vsel %vm70, %v1090, 0
    %1097 = vmatprep.subr.mxu0 0.0
    %1098 = vmatpush1.msra.mxu0 %v756
    %1099 = vmatprep.subr.mxu0 0.0
    %1100 = vmatpush1.msra.mxu0 %v757
    %1101 = vmatprep.subr.mxu0 0.0
    %1102 = vmatpush1.msra.mxu0 0.0
    %1103 = vmatprep.subr.mxu0 0.0
    %1104 = vmatpush1.msra.mxu0 0.0
    %1105 = vmatprep.subr.mxu0 0.0
    %1106 = vmatpush1.msra.mxu0 0.0
    %1107 = vmatprep.subr.mxu0 0.0
    %1108 = vmatpush1.msra.mxu0 0.0
    %1109 = vmatprep.subr.mxu0 0.0
    %1110 = vmatpush1.msra.mxu0 0.0
    %1111 = vmatprep.subr.mxu0 0.0
    %1112 = vmatpush1.msra.mxu0 0.0
    %1113 = vmatprep.subr.mxu0 0.0
    %1114 = vmatpush1.msra.mxu0 0.0
    %1115 = vmatprep.subr.mxu0 0.0
    %1116 = vmatpush1.msra.mxu0 0.0
    %1117 = vmatprep.subr.mxu0 0.0
    %1118 = vmatpush1.msra.mxu0 0.0
    %1119 = vmatprep.subr.mxu0 0.0
    %1120 = vmatpush1.msra.mxu0 0.0
    %1121 = vmatprep.subr.mxu0 0.0
    %1122 = vmatpush1.msra.mxu0 0.0
    %1123 = vmatprep.subr.mxu0 0.0
    %1124 = vmatpush1.msra.mxu0 0.0
    %1125 = vmatprep.subr.mxu0 0.0
    %1126 = vmatpush1.msra.mxu0 0.0
    %1127 = vmatprep.subr.mxu0 0.0
    %1128 = vmatpush1.msra.mxu0 0.0
    %1129 = vmatprep.subr.mxu0 0.0
    %1130 = vmatpush1.msra.mxu0 0.0
    %1131 = vmatprep.subr.mxu0 0.0
    %1132 = vmatpush1.msra.mxu0 0.0
    %1133 = vmatprep.subr.mxu0 0.0
    %1134 = vmatpush1.msra.mxu0 0.0
    %1135 = vmatprep.subr.mxu0 0.0
    %1136 = vmatpush1.msra.mxu0 0.0
    %1137 = vmatprep.subr.mxu0 0.0
    %1138 = vmatpush1.msra.mxu0 0.0
    %1139 = vmatprep.subr.mxu0 0.0
    %1140 = vmatpush1.msra.mxu0 0.0
    %1141 = vmatprep.subr.mxu0 0.0
    %1142 = vmatpush1.msra.mxu0 0.0
    %1143 = vmatprep.subr.mxu0 0.0
    %1144 = vmatpush1.msra.mxu0 0.0
    %1145 = vmatprep.subr.mxu0 0.0
    %1146 = vmatpush1.msra.mxu0 0.0
    %1147 = vmatprep.subr.mxu0 0.0
    %1148 = vmatpush1.msra.mxu0 0.0
    %1149 = vmatprep.subr.mxu0 0.0
    %1150 = vmatpush1.msra.mxu0 0.0
    %1151 = vmatprep.subr.mxu0 0.0
    %1152 = vmatpush1.msra.mxu0 0.0
    %1153 = vmatprep.subr.mxu0 0.0
    %1154 = vmatpush1.msra.mxu0 0.0
    %1155 = vmatprep.subr.mxu0 0.0
    %1156 = vmatpush1.msra.mxu0 0.0
    %1157 = vmatprep.subr.mxu0 0.0
    %1158 = vmatpush1.msra.mxu0 0.0
    %1159 = vmatprep.subr.mxu0 0.0
    %1160 = vmatpush1.msra.mxu0 0.0
    %1161 = vmatprep.mubr.f32.mxu0 0.0
    %1162 = vmatmul.mubr.f32.gmra.mrb[0].mxu0 %v1092
    %v1163 = vpop.f32.mrb[0].mxu0
    %v1164 = vadd.f32 0.0, %v1163
    %v1165 = vpop.f32.mrb[0].mxu0
    %1166 = vmatprep.mubr.f32.mxu0 0.0
    %1167 = vmatmul.mubr.f32.gmra.mrb[0].mxu0 %v1095
    %v1168 = vpop.f32.mrb[0].mxu0
    %v1169 = vadd.f32 0.0, %v1168
    %v1170 = vpop.f32.mrb[0].mxu0
    %1171 = vdwg.mxu0
    %1172 = vmatprep.subr.mxu0 0.0
    %1173 = vmatpush1.msra.mxu0 %v1164
    %1174 = vmatprep.subr.mxu0 0.0
    %1175 = vmatpush1.msra.mxu0 %v1169
    %1176 = vmatprep.subr.mxu0 0.0
    %1177 = vmatpush1.msra.mxu0 0.0
    %1178 = vmatprep.subr.mxu0 0.0
    %1179 = vmatpush1.msra.mxu0 0.0
    %1180 = vmatprep.subr.mxu0 0.0
    %1181 = vmatpush1.msra.mxu0 0.0
    %1182 = vmatprep.subr.mxu0 0.0
    %1183 = vmatpush1.msra.mxu0 0.0
    %1184 = vmatprep.subr.mxu0 0.0
    %1185 = vmatpush1.msra.mxu0 0.0
    %1186 = vmatprep.subr.mxu0 0.0
    %1187 = vmatpush1.msra.mxu0 0.0
    %1188 = vmatprep.subr.mxu0 0.0
    %1189 = vmatpush1.msra.mxu0 0.0
    %1190 = vmatprep.subr.mxu0 0.0
    %1191 = vmatpush1.msra.mxu0 0.0
    %1192 = vmatprep.subr.mxu0 0.0
    %1193 = vmatpush1.msra.mxu0 0.0
    %1194 = vmatprep.subr.mxu0 0.0
    %1195 = vmatpush1.msra.mxu0 0.0
    %1196 = vmatprep.subr.mxu0 0.0
    %1197 = vmatpush1.msra.mxu0 0.0
    %1198 = vmatprep.subr.mxu0 0.0
    %1199 = vmatpush1.msra.mxu0 0.0
    %1200 = vmatprep.subr.mxu0 0.0
    %1201 = vmatpush1.msra.mxu0 0.0
    %1202 = vmatprep.subr.mxu0 0.0
    %1203 = vmatpush1.msra.mxu0 0.0
    %1204 = vmatprep.subr.mxu0 0.0
    %1205 = vmatpush1.msra.mxu0 0.0
    %1206 = vmatprep.subr.mxu0 0.0
    %1207 = vmatpush1.msra.mxu0 0.0
    %1208 = vmatprep.subr.mxu0 0.0
    %1209 = vmatpush1.msra.mxu0 0.0
    %1210 = vmatprep.subr.mxu0 0.0
    %1211 = vmatpush1.msra.mxu0 0.0
    %1212 = vmatprep.subr.mxu0 0.0
    %1213 = vmatpush1.msra.mxu0 0.0
    %1214 = vmatprep.subr.mxu0 0.0
    %1215 = vmatpush1.msra.mxu0 0.0
    %1216 = vmatprep.subr.mxu0 0.0
    %1217 = vmatpush1.msra.mxu0 0.0
    %1218 = vmatprep.subr.mxu0 0.0
    %1219 = vmatpush1.msra.mxu0 0.0
    %1220 = vmatprep.subr.mxu0 0.0
    %1221 = vmatpush1.msra.mxu0 0.0
    %1222 = vmatprep.subr.mxu0 0.0
    %1223 = vmatpush1.msra.mxu0 0.0
    %1224 = vmatprep.subr.mxu0 0.0
    %1225 = vmatpush1.msra.mxu0 0.0
    %1226 = vmatprep.subr.mxu0 0.0
    %1227 = vmatpush1.msra.mxu0 0.0
    %1228 = vmatprep.subr.mxu0 0.0
    %1229 = vmatpush1.msra.mxu0 0.0
    %1230 = vmatprep.subr.mxu0 0.0
    %1231 = vmatpush1.msra.mxu0 0.0
    %1232 = vmatprep.subr.mxu0 0.0
    %1233 = vmatpush1.msra.mxu0 0.0
    %1234 = vmatprep.subr.mxu0 0.0
    %1235 = vmatpush1.msra.mxu0 0.0
    %1236 = vmatprep.mubr.f32.mxu0 0.0
    %1237 = vmatmul.mubr.f32.gmra.mrb[0].mxu0 %v843
    %v1238 = vpop.f32.mrb[0].mxu0
    %v1239 = vadd.f32 0.0, %v1238
    %v1240 = vpop.f32.mrb[0].mxu0
    %1241 = vmatprep.mubr.f32.mxu0 0.0
    %1242 = vmatmul.mubr.f32.gmra.mrb[0].mxu0 %v846
    %v1243 = vpop.f32.mrb[0].mxu0
    %v1244 = vadd.f32 0.0, %v1243
    %v1245 = vpop.f32.mrb[0].mxu0
    %1246 = vdwg.mxu0
    %s1247 = scalar_lea.vmem [#allocation7], 96
    %1248 = vst.msk [vmem:[%s1247] sm:$0xff] %vm70, %v1239
    %1249 = vst.msk [vmem:[%s1247 + $0x8] sm:$0xff] %vm70, %v1244
    %s1250 = scalar_lea.vmem [#allocation4], 112
    %v1251 = vld [vmem:[%s1250] sm:$0xff]
    %v1252 = vld [vmem:[%s1250 + $0x8] sm:$0xff]
    %v1254 = vsel %vm70, %v1251, 0
    %v1257 = vsel %vm70, %v1252, 0
    %1259 = vmatprep.subr.mxu0 0.0
    %1260 = vmatpush1.msra.mxu0 %v756
    %1261 = vmatprep.subr.mxu0 0.0
    %1262 = vmatpush1.msra.mxu0 %v757
    %1263 = vmatprep.subr.mxu0 0.0
    %1264 = vmatpush1.msra.mxu0 0.0
    %1265 = vmatprep.subr.mxu0 0.0
    %1266 = vmatpush1.msra.mxu0 0.0
    %1267 = vmatprep.subr.mxu0 0.0
    %1268 = vmatpush1.msra.mxu0 0.0
    %1269 = vmatprep.subr.mxu0 0.0
    %1270 = vmatpush1.msra.mxu0 0.0
    %1271 = vmatprep.subr.mxu0 0.0
    %1272 = vmatpush1.msra.mxu0 0.0
    %1273 = vmatprep.subr.mxu0 0.0
    %1274 = vmatpush1.msra.mxu0 0.0
    %1275 = vmatprep.subr.mxu0 0.0
    %1276 = vmatpush1.msra.mxu0 0.0
    %1277 = vmatprep.subr.mxu0 0.0
    %1278 = vmatpush1.msra.mxu0 0.0
    %1279 = vmatprep.subr.mxu0 0.0
    %1280 = vmatpush1.msra.mxu0 0.0
    %1281 = vmatprep.subr.mxu0 0.0
    %1282 = vmatpush1.msra.mxu0 0.0
    %1283 = vmatprep.subr.mxu0 0.0
    %1284 = vmatpush1.msra.mxu0 0.0
    %1285 = vmatprep.subr.mxu0 0.0
    %1286 = vmatpush1.msra.mxu0 0.0
    %1287 = vmatprep.subr.mxu0 0.0
    %1288 = vmatpush1.msra.mxu0 0.0
    %1289 = vmatprep.subr.mxu0 0.0
    %1290 = vmatpush1.msra.mxu0 0.0
    %1291 = vmatprep.subr.mxu0 0.0
    %1292 = vmatpush1.msra.mxu0 0.0
    %1293 = vmatprep.subr.mxu0 0.0
    %1294 = vmatpush1.msra.mxu0 0.0
    %1295 = vmatprep.subr.mxu0 0.0
    %1296 = vmatpush1.msra.mxu0 0.0
    %1297 = vmatprep.subr.mxu0 0.0
    %1298 = vmatpush1.msra.mxu0 0.0
    %1299 = vmatprep.subr.mxu0 0.0
    %1300 = vmatpush1.msra.mxu0 0.0
    %1301 = vmatprep.subr.mxu0 0.0
    %1302 = vmatpush1.msra.mxu0 0.0
    %1303 = vmatprep.subr.mxu0 0.0
    %1304 = vmatpush1.msra.mxu0 0.0
    %1305 = vmatprep.subr.mxu0 0.0
    %1306 = vmatpush1.msra.mxu0 0.0
    %1307 = vmatprep.subr.mxu0 0.0
    %1308 = vmatpush1.msra.mxu0 0.0
    %1309 = vmatprep.subr.mxu0 0.0
    %1310 = vmatpush1.msra.mxu0 0.0
    %1311 = vmatprep.subr.mxu0 0.0
    %1312 = vmatpush1.msra.mxu0 0.0
    %1313 = vmatprep.subr.mxu0 0.0
    %1314 = vmatpush1.msra.mxu0 0.0
    %1315 = vmatprep.subr.mxu0 0.0
    %1316 = vmatpush1.msra.mxu0 0.0
    %1317 = vmatprep.subr.mxu0 0.0
    %1318 = vmatpush1.msra.mxu0 0.0
    %1319 = vmatprep.subr.mxu0 0.0
    %1320 = vmatpush1.msra.mxu0 0.0
    %1321 = vmatprep.subr.mxu0 0.0
    %1322 = vmatpush1.msra.mxu0 0.0
    %1323 = vmatprep.mubr.f32.mxu0 0.0
    %1324 = vmatmul.mubr.f32.gmra.mrb[0].mxu0 %v1254
    %v1325 = vpop.f32.mrb[0].mxu0
    %v1326 = vadd.f32 0.0, %v1325
    %v1327 = vpop.f32.mrb[0].mxu0
    %1328 = vmatprep.mubr.f32.mxu0 0.0
    %1329 = vmatmul.mubr.f32.gmra.mrb[0].mxu0 %v1257
    %v1330 = vpop.f32.mrb[0].mxu0
    %v1331 = vadd.f32 0.0, %v1330
    %v1332 = vpop.f32.mrb[0].mxu0
    %1333 = vdwg.mxu0
    %1334 = vmatprep.subr.mxu0 0.0
    %1335 = vmatpush1.msra.mxu0 %v1326
    %1336 = vmatprep.subr.mxu0 0.0
    %1337 = vmatpush1.msra.mxu0 %v1331
    %1338 = vmatprep.subr.mxu0 0.0
    %1339 = vmatpush1.msra.mxu0 0.0
    %1340 = vmatprep.subr.mxu0 0.0
    %1341 = vmatpush1.msra.mxu0 0.0
    %1342 = vmatprep.subr.mxu0 0.0
    %1343 = vmatpush1.msra.mxu0 0.0
    %1344 = vmatprep.subr.mxu0 0.0
    %1345 = vmatpush1.msra.mxu0 0.0
    %1346 = vmatprep.subr.mxu0 0.0
    %1347 = vmatpush1.msra.mxu0 0.0
    %1348 = vmatprep.subr.mxu0 0.0
    %1349 = vmatpush1.msra.mxu0 0.0
    %1350 = vmatprep.subr.mxu0 0.0
    %1351 = vmatpush1.msra.mxu0 0.0
    %1352 = vmatprep.subr.mxu0 0.0
    %1353 = vmatpush1.msra.mxu0 0.0
    %1354 = vmatprep.subr.mxu0 0.0
    %1355 = vmatpush1.msra.mxu0 0.0
    %1356 = vmatprep.subr.mxu0 0.0
    %1357 = vmatpush1.msra.mxu0 0.0
    %1358 = vmatprep.subr.mxu0 0.0
    %1359 = vmatpush1.msra.mxu0 0.0
    %1360 = vmatprep.subr.mxu0 0.0
    %1361 = vmatpush1.msra.mxu0 0.0
    %1362 = vmatprep.subr.mxu0 0.0
    %1363 = vmatpush1.msra.mxu0 0.0
    %1364 = vmatprep.subr.mxu0 0.0
    %1365 = vmatpush1.msra.mxu0 0.0
    %1366 = vmatprep.subr.mxu0 0.0
    %1367 = vmatpush1.msra.mxu0 0.0
    %1368 = vmatprep.subr.mxu0 0.0
    %1369 = vmatpush1.msra.mxu0 0.0
    %1370 = vmatprep.subr.mxu0 0.0
    %1371 = vmatpush1.msra.mxu0 0.0
    %1372 = vmatprep.subr.mxu0 0.0
    %1373 = vmatpush1.msra.mxu0 0.0
    %1374 = vmatprep.subr.mxu0 0.0
    %1375 = vmatpush1.msra.mxu0 0.0
    %1376 = vmatprep.subr.mxu0 0.0
    %1377 = vmatpush1.msra.mxu0 0.0
    %1378 = vmatprep.subr.mxu0 0.0
    %1379 = vmatpush1.msra.mxu0 0.0
    %1380 = vmatprep.subr.mxu0 0.0
    %1381 = vmatpush1.msra.mxu0 0.0
    %1382 = vmatprep.subr.mxu0 0.0
    %1383 = vmatpush1.msra.mxu0 0.0
    %1384 = vmatprep.subr.mxu0 0.0
    %1385 = vmatpush1.msra.mxu0 0.0
    %1386 = vmatprep.subr.mxu0 0.0
    %1387 = vmatpush1.msra.mxu0 0.0
    %1388 = vmatprep.subr.mxu0 0.0
    %1389 = vmatpush1.msra.mxu0 0.0
    %1390 = vmatprep.subr.mxu0 0.0
    %1391 = vmatpush1.msra.mxu0 0.0
    %1392 = vmatprep.subr.mxu0 0.0
    %1393 = vmatpush1.msra.mxu0 0.0
    %1394 = vmatprep.subr.mxu0 0.0
    %1395 = vmatpush1.msra.mxu0 0.0
    %1396 = vmatprep.subr.mxu0 0.0
    %1397 = vmatpush1.msra.mxu0 0.0
    %1398 = vmatprep.mubr.f32.mxu0 0.0
    %1399 = vmatmul.mubr.f32.gmra.mrb[0].mxu0 %v843
    %v1400 = vpop.f32.mrb[0].mxu0
    %v1401 = vadd.f32 0.0, %v1400
    %v1402 = vpop.f32.mrb[0].mxu0
    %1403 = vmatprep.mubr.f32.mxu0 0.0
    %1404 = vmatmul.mubr.f32.gmra.mrb[0].mxu0 %v846
    %v1405 = vpop.f32.mrb[0].mxu0
    %v1406 = vadd.f32 0.0, %v1405
    %v1407 = vpop.f32.mrb[0].mxu0
    %1408 = vdwg.mxu0
    %s1409 = scalar_lea.vmem [#allocation7], 112
    %1410 = vst.msk [vmem:[%s1409] sm:$0xff] %vm70, %v1401
    %1411 = vst.msk [vmem:[%s1409 + $0x8] sm:$0xff] %vm70, %v1406
    // Predicated region
    $region10: #{tpu_custom_call.1} parent=1 // pred_check
      _
    $region11: #{tpu_custom_call.1} parent=1 // pred_check_branch
      %1413 = sbr.rel (0) target = $region13
    $region12: #{tpu_custom_call.1} parent=1 // pred_region
      %s1415 = ssub.s32 2048, 2048
      %1416 = vsyncadd [#allocation6], %s1415
      %s1417 = sshll.u32 [#allocation7], 4
      %s1418 = int_to_ptr.vmem [resolvable:$true] %s1417
      %1423 = dma.vmem_to_hbm [thread:$0]  %s1418, 2048, %s2, [#allocation6], 128, 128, 8
    $region13: #{tpu_custom_call.1} parent=1 // pred_fallthru
      _
    // Predicated region
    $region14: #{tpu_custom_call.1} parent=1 // pred_check
      _
    $region15: #{tpu_custom_call.1} parent=1 // pred_check_branch
      %1425 = sbr.rel (0) target = $region17
    $region16: #{tpu_custom_call.1} parent=1 // pred_region
      %1426 = dma.done [#allocation6], 2048
    $region17: #{tpu_custom_call.1} parent=1 // pred_fallthru
      _
    %1427 = vsyncpa [#allocation5], 1
    %1428 = vsyncpa [#allocation6], 1

</llo_original>
